<compile_context>
chip_gen: v7x
topology: tpu7x:2x2x1
jax: 0.10.0
libtpu: 0.0.40
codegen_flags: <defaults>
</compile_context>

<pallas_src>
import functools

import jax
import jax.numpy as jnp
from jax import lax
from jax.experimental import pallas as pl
from jax.experimental.pallas import tpu as pltpu


def _round_up(x, m):
    return (x + m - 1) // m * m


def _device_kind():
    try:
        return jax.devices()[0].device_kind.lower()
    except Exception:
        return ""


def _pick_compute_dtype():
    """bf16 input/weight stream on v6e/v7x (halves DMA/VMEM); f32 elsewhere (v5e lacks bf16 VPU/EUP)."""
    kind = _device_kind()
    if ("v6" in kind) or ("v7" in kind):
        return jnp.bfloat16
    return jnp.float32


def _lstm_kernel(x_ref, wih_ref, b0_ref, whh_ref, wout_ref, bout_ref,
                 out_ref, pre_scr, h_scr, c_scr,
                 *, t_valid, needs_mask, unroll):
    """LSTM layer-0 recurrence + output Linear over one (batch-tile, time-chunk) grid cell.

    x_ref   : (TT, TB, D)        raw concatenated input chunk (time-major)
    wih_ref : (D, 4H)            W_ih^T, gate order i|f|o|g
    b0_ref  : (1, 4H)            b_ih + b_hh (f32), gate order i|f|o|g
    whh_ref : (H, 4H)            W_hh^T, gate order i|f|o|g
    wout_ref: (H, O_pad)         output Linear weight^T (zero lane-padded)
    bout_ref: (1, O_pad)         output Linear bias (zero lane-padded)
    out_ref : (TB, O_pad)        written only on the last time chunk
    pre_scr : (TT*TB, 4H) f32    per-chunk fused input projection
    h_scr, c_scr : (TB, H) f32   carried across the time grid axis
    """
    t_blk = pl.program_id(1)
    nt = pl.num_programs(1)
    tt, tb, d = x_ref.shape
    H = whh_ref.shape[0]

    @pl.when(t_blk == 0)
    def _():
        h_scr[...] = jnp.zeros_like(h_scr)
        c_scr[...] = jnp.zeros_like(c_scr)

    # Fused input projection: one (tt*tb, D) x (D, 4H) matmul per grid cell, off the
    # serial recurrence path.  pre = x @ W_ih^T + (b_ih + b_hh), accumulated in f32.
    x2d = x_ref[...].reshape(tt * tb, d)
    pre_scr[...] = (
        jnp.dot(x2d, wih_ref[...], preferred_element_type=jnp.float32)
        + b0_ref[...]
    )

    whh = whh_ref[...]  # hoist the recurrent-weight load out of the step loop

    def make_step(masked):
        def step(i, carry):
            h, c = carry
            start = pl.multiple_of(i * tb, tb)
            gates = pre_scr[pl.ds(start, tb), :] + jnp.dot(
                h.astype(whh.dtype), whh, preferred_element_type=jnp.float32)
            sig = jax.nn.sigmoid(gates[:, : 3 * H])   # i | f | o -> one EUP pass
            g_g = jnp.tanh(gates[:, 3 * H:])          # g         -> one EUP pass
            i_g = sig[:, 0 * H:1 * H]
            f_g = sig[:, 1 * H:2 * H]
            o_g = sig[:, 2 * H:3 * H]
            c_new = f_g * c + i_g * g_g
            h_new = o_g * jnp.tanh(c_new)
            if masked:  # static: only the final time chunk can contain padded steps
                keep = (t_blk * tt + i) < t_valid
                h_new = jnp.where(keep, h_new, h)
                c_new = jnp.where(keep, c_new, c)
            return h_new, c_new
        return step

    def run_steps(masked):
        h, c = lax.fori_loop(0, tt, make_step(masked),
                             (h_scr[...], c_scr[...]), unroll=unroll)
        h_scr[...] = h
        c_scr[...] = c

    if needs_mask:
        @pl.when(t_blk != nt - 1)
        def _():
            run_steps(False)

        @pl.when(t_blk == nt - 1)
        def _():
            run_steps(True)
    else:
        run_steps(False)

    @pl.when(t_blk == nt - 1)
    def _():
        out_ref[...] = (
            jnp.dot(h_scr[...], wout_ref[...], preferred_element_type=jnp.float32)
            + bout_ref[...]
        )


@functools.partial(jax.jit, static_argnames=("single_buffer_weights",))
def _forward_jit(primary_input, mask_input, params, *, single_buffer_weights=True):
    kind = _device_kind()
    compute_dtype = _pick_compute_dtype()

    # cat((primary, mask.unsqueeze(-1)), dim=2) -> (B, T, D)
    x = jnp.concatenate([primary_input, mask_input[..., None]], axis=2)
    x = x.astype(compute_dtype)
    B, T, D = x.shape

    w_ih0 = params["w_ih_l0"]                                   # (4H, D)
    w_hh0 = params["w_hh_l0"]                                   # (4H, H)
    b0 = (params["b_ih_l0"] + params["b_hh_l0"]).astype(jnp.float32)
    w_out = params["w_out"].astype(jnp.float32)                 # (O, H)
    b_out = params["b_out"].astype(jnp.float32)                 # (O,)
    H = w_hh0.shape[1]
    O = w_out.shape[0]

    # Reorder gate blocks i|f|g|o -> i|f|o|g so the kernel issues one contiguous sigmoid
    # over 3H and one tanh over H.
    def reorder(w):
        return jnp.concatenate([w[:2 * H], w[3 * H:4 * H], w[2 * H:3 * H]], axis=0)

    wih_t = jnp.transpose(reorder(w_ih0)).astype(compute_dtype)  # (D, 4H)
    whh_t = jnp.transpose(reorder(w_hh0)).astype(compute_dtype)  # (H, 4H)
    b0_r = reorder(b0).reshape(1, 4 * H)                         # (1, 4H) f32

    # ---------------- tiling (H / batch / chip aware) ----------------
    sub = 16 if compute_dtype == jnp.bfloat16 else 8             # sublane packing
    two_tc = any(s in kind for s in ("v7", "v4"))                # 2 TensorCores / megacore
    if two_tc and B >= 2 * sub:
        TB = min(_round_up(-(-B // 2), sub), 128)                # >=2 batch tiles -> both TCs
    else:
        TB = min(_round_up(B, sub), 128)
    B_pad = _round_up(B, TB)

    # Keep the single-buffered f32 projection scratch (TT*TB x 4H) under ~8 MiB.
    tt_cap = max(8, (8 * 1024 * 1024) // (TB * 4 * H * 4))
    TT = max(1, min(T, 128, tt_cap))
    T_pad = _round_up(T, TT)

    # Bounded unroll: per-step live set ~ 2*TB*4H f32; full unroll only when it fits vregs.
    live_bytes = 2 * TB * 4 * H * 4
    if live_bytes <= 32 * 1024:
        unroll = True
    else:
        unroll = max(1, min(TT, 8 if live_bytes <= 128 * 1024 else 4))

    O_pad = _round_up(max(O, 1), 128)                            # lane-dense output store

    x_tm = jnp.transpose(x, (1, 0, 2))                           # time-major (T, B, D)
    x_tm = jnp.pad(x_tm, ((0, T_pad - T), (0, B_pad - B), (0, 0)))

    wout_pad = jnp.zeros((H, O_pad), jnp.float32).at[:, :O].set(jnp.transpose(w_out))
    bout_pad = jnp.zeros((1, O_pad), jnp.float32).at[0, :O].set(b_out)

    # Explicit VMEM budget (x double buffer + weights + scratch), with headroom.
    esize = jnp.dtype(compute_dtype).itemsize
    vmem_est = (2 * TT * TB * D * esize                          # x double buffer
                + 2 * (D + H) * 4 * H * esize                    # wih + whh
                + (4 * H + 2 * H * O_pad + 2 * O_pad) * 4        # b0, wout, bout
                + 2 * TB * O_pad * 4                             # out double buffer
                + TT * TB * 4 * H * 4                            # projection scratch
                + 2 * TB * H * 4)                                # h, c scratch
    vmem_cap = (48 << 20) if "v7" in kind else (100 << 20)       # v7x has 64 MiB physical
    vmem_limit = int(min(vmem_cap, max(32 << 20, 2 * vmem_est)))

    if single_buffer_weights:
        def wspec(shape):  # constant-index weights: no re-DMA, so single-buffer them
            return pl.BlockSpec(shape, lambda b, t: (0, 0),
                                pipeline_mode=pl.Buffered(1))
    else:
        def wspec(shape):
            return pl.BlockSpec(shape, lambda b, t: (0, 0))

    grid = (B_pad // TB, T_pad // TT)
    kernel = functools.partial(
        _lstm_kernel, t_valid=T, needs_mask=(T_pad != T), unroll=unroll)

    out_pad = pl.pallas_call(
        kernel,
        out_shape=jax.ShapeDtypeStruct((B_pad, O_pad), jnp.float32),
        grid_spec=pltpu.PrefetchScalarGridSpec(
            num_scalar_prefetch=0,
            grid=grid,
            in_specs=[
                pl.BlockSpec((TT, TB, D), lambda b, t: (t, b, 0)),
                wspec((D, 4 * H)),
                wspec((1, 4 * H)),
                wspec((H, 4 * H)),
                wspec((H, O_pad)),
                wspec((1, O_pad)),
            ],
            out_specs=pl.BlockSpec((TB, O_pad), lambda b, t: (b, 0)),
            scratch_shapes=[
                pltpu.VMEM((TT * TB, 4 * H), jnp.float32),
                pltpu.VMEM((TB, H), jnp.float32),
                pltpu.VMEM((TB, H), jnp.float32),
            ],
        ),
        compiler_params=pltpu.CompilerParams(
            dimension_semantics=("parallel", "arbitrary"),
            vmem_limit_bytes=vmem_limit),
    )(x_tm, wih_t, b0_r, whh_t, wout_pad, bout_pad)

    return out_pad[:B, :O]


def lstm_x1_x2_masking_forward(primary_input, mask_input, params):
    try:
        return jax.block_until_ready(
            _forward_jit(primary_input, mask_input, params,
                         single_buffer_weights=True))
    except Exception:
        # pl.Buffered(1) single-buffering not supported on this jax version ->
        # fall back to default double-buffered weight specs.
        return jax.block_until_ready(
            _forward_jit(primary_input, mask_input, params,
                         single_buffer_weights=False))


def init_params(key, input_dim, hidden_size, num_layers, output_dim, aux_dim):
    """Deterministic init mimicking PyTorch uniform(-1/sqrt(H), 1/sqrt(H))."""
    D = input_dim + aux_dim
    k = 1.0 / jnp.sqrt(jnp.float32(hidden_size))
    params = {}
    keys = jax.random.split(key, 4 * num_layers + 2)
    ki = 0
    for layer in range(num_layers):
        in_sz = D if layer == 0 else hidden_size
        params[f"w_ih_l{layer}"] = jax.random.uniform(
            keys[ki], (4 * hidden_size, in_sz), jnp.float32, -k, k); ki += 1
        params[f"w_hh_l{layer}"] = jax.random.uniform(
            keys[ki], (4 * hidden_size, hidden_size), jnp.float32, -k, k); ki += 1
        params[f"b_ih_l{layer}"] = jax.random.uniform(
            keys[ki], (4 * hidden_size,), jnp.float32, -k, k); ki += 1
        params[f"b_hh_l{layer}"] = jax.random.uniform(
            keys[ki], (4 * hidden_size,), jnp.float32, -k, k); ki += 1
    k_lin = 1.0 / jnp.sqrt(jnp.float32(hidden_size))
    params["w_out"] = jax.random.uniform(
        keys[ki], (output_dim, hidden_size), jnp.float32, -k_lin, k_lin); ki += 1
    params["b_out"] = jax.random.uniform(
        keys[ki], (output_dim,), jnp.float32, -k_lin, k_lin)
    return params


def _reference_forward(primary_input, mask_input, params):
    """Pure-JAX f32 reference (original PyTorch gate order) for correctness checking."""
    x = jnp.concatenate([primary_input, mask_input[..., None]], axis=2)
    B, T, _ = x.shape
    H = params["w_hh_l0"].shape[1]
    h = jnp.zeros((B, H), jnp.float32)
    c = jnp.zeros((B, H), jnp.float32)
    for t in range(T):
        gates = (x[:, t, :] @ params["w_ih_l0"].T
                 + h @ params["w_hh_l0"].T
                 + params["b_ih_l0"] + params["b_hh_l0"])
        i_g = jax.nn.sigmoid(gates[:, 0 * H:1 * H])
        f_g = jax.nn.sigmoid(gates[:, 1 * H:2 * H])
        g_g = jnp.tanh(gates[:, 2 * H:3 * H])
        o_g = jax.nn.sigmoid(gates[:, 3 * H:4 * H])
        c = f_g * c + i_g * g_g
        h = o_g * jnp.tanh(c)
    return h @ params["w_out"].T + params["b_out"]


if __name__ == "__main__":
    # Small shapes consistent with the module's forward.
    batch, seq_len = 2, 8
    input_dim, aux_dim = 4, 1
    hidden_size, num_layers, output_dim = 32, 2, 3

    root = jax.random.PRNGKey(0)
    k_params, k_x, k_mask = jax.random.split(root, 3)

    params = init_params(k_params, input_dim, hidden_size, num_layers,
                         output_dim, aux_dim)

    primary_input = jax.random.normal(k_x, (batch, seq_len, input_dim), jnp.float32)
    mask_input = (jax.random.uniform(k_mask, (batch, seq_len)) > 0.5).astype(jnp.float32)

    out = lstm_x1_x2_masking_forward(primary_input, mask_input, params)
    out = jax.block_until_ready(out)

    ref = _reference_forward(primary_input, mask_input, params)
    tol = 5e-2 if _pick_compute_dtype() == jnp.bfloat16 else 2e-5
    assert out.shape == (batch, output_dim)
    assert jnp.allclose(out, ref, atol=tol, rtol=tol)

    print("KERNEL_OK")
</pallas_src>

<mosaic_0001>
module attributes {stable_mosaic.version = 11 : i64} {
  func.func @_lstm_kernel(%arg0: i32, %arg1: i32, %arg2: memref<8x8x5xf32, #tpu.memory_space<vmem>>, %arg3: memref<5x128xf32, #tpu.memory_space<vmem>>, %arg4: memref<1x128xf32, #tpu.memory_space<vmem>>, %arg5: memref<32x128xf32, #tpu.memory_space<vmem>>, %arg6: memref<32x128xf32, #tpu.memory_space<vmem>>, %arg7: memref<1x128xf32, #tpu.memory_space<vmem>>, %arg8: memref<8x128xf32, #tpu.memory_space<vmem>>, %arg9: memref<64x128xf32, #tpu.memory_space<vmem>>, %arg10: memref<8x32xf32, #tpu.memory_space<vmem>>, %arg11: memref<8x32xf32, #tpu.memory_space<vmem>>) attributes {dimension_semantics = [#tpu.dimension_semantics<parallel>, #tpu.dimension_semantics<arbitrary>], iteration_bounds = array<i64: 1, 1>, scalar_prefetch = 0 : i64, scratch_operands = 3 : i64, tpu.core_type = #tpu.core_type<tc>, window_params = [{transform_indices = @transform_0, window_bounds = array<i64: 8, 8, 5>}, {pipeline_mode = #tpu.pipeline_mode<synchronous>, transform_indices = @transform_1, window_bounds = array<i64: 5, 128>}, {pipeline_mode = #tpu.pipeline_mode<synchronous>, transform_indices = @transform_2, window_bounds = array<i64: 1, 128>}, {pipeline_mode = #tpu.pipeline_mode<synchronous>, transform_indices = @transform_3, window_bounds = array<i64: 32, 128>}, {pipeline_mode = #tpu.pipeline_mode<synchronous>, transform_indices = @transform_4, window_bounds = array<i64: 32, 128>}, {pipeline_mode = #tpu.pipeline_mode<synchronous>, transform_indices = @transform_5, window_bounds = array<i64: 1, 128>}, {transform_indices = @transform_6, window_bounds = array<i64: 8, 128>}]} {
    %c0_i32 = arith.constant 0 : i32
    %0 = arith.cmpi eq, %arg1, %c0_i32 : i32
    %1 = arith.extui %0 : i1 to i32
    %c0_i32_0 = arith.constant 0 : i32
    %2 = arith.cmpi ne, %1, %c0_i32_0 : i32
    scf.if %2 {
      %cst_54 = arith.constant 0.000000e+00 : f32
      %195 = vector.broadcast %cst_54 : f32 to vector<8x32xf32>
      %c0_55 = arith.constant 0 : index
      %c0_56 = arith.constant 0 : index
      %196 = vector.load %arg10[%c0_55, %c0_56] : memref<8x32xf32, #tpu.memory_space<vmem>>, vector<8x32xf32>
      tpu.vector_store %arg10[%c0_55, %c0_56], %195 {strides = array<i32>} : memref<8x32xf32, #tpu.memory_space<vmem>>, vector<8x32xf32>,
      %cst_57 = arith.constant 0.000000e+00 : f32
      %197 = vector.broadcast %cst_57 : f32 to vector<8x32xf32>
      %c0_58 = arith.constant 0 : index
      %c0_59 = arith.constant 0 : index
      %198 = vector.load %arg11[%c0_58, %c0_59] : memref<8x32xf32, #tpu.memory_space<vmem>>, vector<8x32xf32>
      tpu.vector_store %arg11[%c0_58, %c0_59], %197 {strides = array<i32>} : memref<8x32xf32, #tpu.memory_space<vmem>>, vector<8x32xf32>,
    } else {
    }
    %c0 = arith.constant 0 : index
    %c0_1 = arith.constant 0 : index
    %c0_2 = arith.constant 0 : index
    %3 = vector.load %arg2[%c0, %c0_1, %c0_2] : memref<8x8x5xf32, #tpu.memory_space<vmem>>, vector<8x8x5xf32>
    %4 = vector.shape_cast %3 : vector<8x8x5xf32> to vector<64x5xf32>
    %c0_3 = arith.constant 0 : index
    %c0_4 = arith.constant 0 : index
    %5 = vector.load %arg3[%c0_3, %c0_4] : memref<5x128xf32, #tpu.memory_space<vmem>>, vector<5x128xf32>
    %cst = arith.constant dense<0.000000e+00> : vector<64x128xf32>
    %6 = tpu.matmul %4, %5, %cst {dimension_numbers = #tpu.dot_dimension_numbers<[1], [0], [0], [1], [0, 0, 1, 1], [], []>} : vector<64x5xf32>, vector<5x128xf32>, vector<64x128xf32> -> vector<64x128xf32>
    %c0_5 = arith.constant 0 : index
    %c0_6 = arith.constant 0 : index
    %7 = vector.load %arg4[%c0_5, %c0_6] : memref<1x128xf32, #tpu.memory_space<vmem>>, vector<1x128xf32>
    %8 = vector.broadcast %7 : vector<1x128xf32> to vector<64x128xf32>
    %9 = arith.addf %6, %8 : vector<64x128xf32>
    %c0_7 = arith.constant 0 : index
    %c0_8 = arith.constant 0 : index
    %10 = vector.load %arg9[%c0_7, %c0_8] : memref<64x128xf32, #tpu.memory_space<vmem>>, vector<64x128xf32>
    tpu.vector_store %arg9[%c0_7, %c0_8], %9 {strides = array<i32>} : memref<64x128xf32, #tpu.memory_space<vmem>>, vector<64x128xf32>,
    %c0_9 = arith.constant 0 : index
    %c0_10 = arith.constant 0 : index
    %11 = vector.load %arg5[%c0_9, %c0_10] : memref<32x128xf32, #tpu.memory_space<vmem>>, vector<32x128xf32>
    %c0_11 = arith.constant 0 : index
    %c0_12 = arith.constant 0 : index
    %12 = vector.load %arg10[%c0_11, %c0_12] : memref<8x32xf32, #tpu.memory_space<vmem>>, vector<8x32xf32>
    %c0_13 = arith.constant 0 : index
    %c0_14 = arith.constant 0 : index
    %13 = vector.load %arg11[%c0_13, %c0_14] : memref<8x32xf32, #tpu.memory_space<vmem>>, vector<8x32xf32>
    %c0_i32_15 = arith.constant 0 : i32
    %c8_i32 = arith.constant 8 : i32
    %14 = arith.muli %c0_i32_15, %c8_i32 : i32
    %15 = tpu.assume_multiple %14, 8 : i32
    %16 = arith.index_cast %15 : i32 to index
    %c0_16 = arith.constant 0 : index
    %17 = vector.load %arg9[%16, %c0_16] : memref<64x128xf32, #tpu.memory_space<vmem>>, vector<8x128xf32>
    %cst_17 = arith.constant dense<0.000000e+00> : vector<8x128xf32>
    %18 = tpu.matmul %12, %11, %cst_17 {dimension_numbers = #tpu.dot_dimension_numbers<[1], [0], [0], [1], [0, 0, 1, 1], [], []>} : vector<8x32xf32>, vector<32x128xf32>, vector<8x128xf32> -> vector<8x128xf32>
    %19 = arith.addf %17, %18 : vector<8x128xf32>
    %20 = vector.extract_strided_slice %19 {offsets = [0, 0], sizes = [8, 96], strides = [1, 1]} : vector<8x128xf32> to vector<8x96xf32>
    %21 = arith.negf %20 : vector<8x96xf32>
    %22 = math.exp %21 : vector<8x96xf32>
    %cst_18 = arith.constant 1.000000e+00 : f32
    %23 = vector.broadcast %cst_18 : f32 to vector<8x96xf32>
    %24 = arith.addf %23, %22 : vector<8x96xf32>
    %25 = arith.divf %23, %24 : vector<8x96xf32>
    %26 = vector.extract_strided_slice %19 {offsets = [0, 96], sizes = [8, 32], strides = [1, 1]} : vector<8x128xf32> to vector<8x32xf32>
    %27 = math.tanh %26 : vector<8x32xf32>
    %28 = vector.extract_strided_slice %25 {offsets = [0, 0], sizes = [8, 32], strides = [1, 1]} : vector<8x96xf32> to vector<8x32xf32>
    %29 = vector.extract_strided_slice %25 {offsets = [0, 32], sizes = [8, 32], strides = [1, 1]} : vector<8x96xf32> to vector<8x32xf32>
    %30 = vector.extract_strided_slice %25 {offsets = [0, 64], sizes = [8, 32], strides = [1, 1]} : vector<8x96xf32> to vector<8x32xf32>
    %31 = arith.mulf %29, %13 : vector<8x32xf32>
    %32 = arith.mulf %28, %27 : vector<8x32xf32>
    %33 = arith.addf %31, %32 : vector<8x32xf32>
    %34 = math.tanh %33 : vector<8x32xf32>
    %35 = arith.mulf %30, %34 : vector<8x32xf32>
    %c1_i32 = arith.constant 1 : i32
    %c8_i32_19 = arith.constant 8 : i32
    %36 = arith.muli %c1_i32, %c8_i32_19 : i32
    %37 = tpu.assume_multiple %36, 8 : i32
    %38 = arith.index_cast %37 : i32 to index
    %c0_20 = arith.constant 0 : index
    %39 = vector.load %arg9[%38, %c0_20] : memref<64x128xf32, #tpu.memory_space<vmem>>, vector<8x128xf32>
    %cst_21 = arith.constant dense<0.000000e+00> : vector<8x128xf32>
    %40 = tpu.matmul %35, %11, %cst_21 {dimension_numbers = #tpu.dot_dimension_numbers<[1], [0], [0], [1], [0, 0, 1, 1], [], []>} : vector<8x32xf32>, vector<32x128xf32>, vector<8x128xf32> -> vector<8x128xf32>
    %41 = arith.addf %39, %40 : vector<8x128xf32>
    %42 = vector.extract_strided_slice %41 {offsets = [0, 0], sizes = [8, 96], strides = [1, 1]} : vector<8x128xf32> to vector<8x96xf32>
    %43 = arith.negf %42 : vector<8x96xf32>
    %44 = math.exp %43 : vector<8x96xf32>
    %cst_22 = arith.constant 1.000000e+00 : f32
    %45 = vector.broadcast %cst_22 : f32 to vector<8x96xf32>
    %46 = arith.addf %45, %44 : vector<8x96xf32>
    %47 = arith.divf %45, %46 : vector<8x96xf32>
    %48 = vector.extract_strided_slice %41 {offsets = [0, 96], sizes = [8, 32], strides = [1, 1]} : vector<8x128xf32> to vector<8x32xf32>
    %49 = math.tanh %48 : vector<8x32xf32>
    %50 = vector.extract_strided_slice %47 {offsets = [0, 0], sizes = [8, 32], strides = [1, 1]} : vector<8x96xf32> to vector<8x32xf32>
    %51 = vector.extract_strided_slice %47 {offsets = [0, 32], sizes = [8, 32], strides = [1, 1]} : vector<8x96xf32> to vector<8x32xf32>
    %52 = vector.extract_strided_slice %47 {offsets = [0, 64], sizes = [8, 32], strides = [1, 1]} : vector<8x96xf32> to vector<8x32xf32>
    %53 = arith.mulf %51, %33 : vector<8x32xf32>
    %54 = arith.mulf %50, %49 : vector<8x32xf32>
    %55 = arith.addf %53, %54 : vector<8x32xf32>
    %56 = math.tanh %55 : vector<8x32xf32>
    %57 = arith.mulf %52, %56 : vector<8x32xf32>
    %c2_i32 = arith.constant 2 : i32
    %c8_i32_23 = arith.constant 8 : i32
    %58 = arith.muli %c2_i32, %c8_i32_23 : i32
    %59 = tpu.assume_multiple %58, 8 : i32
    %60 = arith.index_cast %59 : i32 to index
    %c0_24 = arith.constant 0 : index
    %61 = vector.load %arg9[%60, %c0_24] : memref<64x128xf32, #tpu.memory_space<vmem>>, vector<8x128xf32>
    %cst_25 = arith.constant dense<0.000000e+00> : vector<8x128xf32>
    %62 = tpu.matmul %57, %11, %cst_25 {dimension_numbers = #tpu.dot_dimension_numbers<[1], [0], [0], [1], [0, 0, 1, 1], [], []>} : vector<8x32xf32>, vector<32x128xf32>, vector<8x128xf32> -> vector<8x128xf32>
    %63 = arith.addf %61, %62 : vector<8x128xf32>
    %64 = vector.extract_strided_slice %63 {offsets = [0, 0], sizes = [8, 96], strides = [1, 1]} : vector<8x128xf32> to vector<8x96xf32>
    %65 = arith.negf %64 : vector<8x96xf32>
    %66 = math.exp %65 : vector<8x96xf32>
    %cst_26 = arith.constant 1.000000e+00 : f32
    %67 = vector.broadcast %cst_26 : f32 to vector<8x96xf32>
    %68 = arith.addf %67, %66 : vector<8x96xf32>
    %69 = arith.divf %67, %68 : vector<8x96xf32>
    %70 = vector.extract_strided_slice %63 {offsets = [0, 96], sizes = [8, 32], strides = [1, 1]} : vector<8x128xf32> to vector<8x32xf32>
    %71 = math.tanh %70 : vector<8x32xf32>
    %72 = vector.extract_strided_slice %69 {offsets = [0, 0], sizes = [8, 32], strides = [1, 1]} : vector<8x96xf32> to vector<8x32xf32>
    %73 = vector.extract_strided_slice %69 {offsets = [0, 32], sizes = [8, 32], strides = [1, 1]} : vector<8x96xf32> to vector<8x32xf32>
    %74 = vector.extract_strided_slice %69 {offsets = [0, 64], sizes = [8, 32], strides = [1, 1]} : vector<8x96xf32> to vector<8x32xf32>
    %75 = arith.mulf %73, %55 : vector<8x32xf32>
    %76 = arith.mulf %72, %71 : vector<8x32xf32>
    %77 = arith.addf %75, %76 : vector<8x32xf32>
    %78 = math.tanh %77 : vector<8x32xf32>
    %79 = arith.mulf %74, %78 : vector<8x32xf32>
    %c3_i32 = arith.constant 3 : i32
    %c8_i32_27 = arith.constant 8 : i32
    %80 = arith.muli %c3_i32, %c8_i32_27 : i32
    %81 = tpu.assume_multiple %80, 8 : i32
    %82 = arith.index_cast %81 : i32 to index
    %c0_28 = arith.constant 0 : index
    %83 = vector.load %arg9[%82, %c0_28] : memref<64x128xf32, #tpu.memory_space<vmem>>, vector<8x128xf32>
    %cst_29 = arith.constant dense<0.000000e+00> : vector<8x128xf32>
    %84 = tpu.matmul %79, %11, %cst_29 {dimension_numbers = #tpu.dot_dimension_numbers<[1], [0], [0], [1], [0, 0, 1, 1], [], []>} : vector<8x32xf32>, vector<32x128xf32>, vector<8x128xf32> -> vector<8x128xf32>
    %85 = arith.addf %83, %84 : vector<8x128xf32>
    %86 = vector.extract_strided_slice %85 {offsets = [0, 0], sizes = [8, 96], strides = [1, 1]} : vector<8x128xf32> to vector<8x96xf32>
    %87 = arith.negf %86 : vector<8x96xf32>
    %88 = math.exp %87 : vector<8x96xf32>
    %cst_30 = arith.constant 1.000000e+00 : f32
    %89 = vector.broadcast %cst_30 : f32 to vector<8x96xf32>
    %90 = arith.addf %89, %88 : vector<8x96xf32>
    %91 = arith.divf %89, %90 : vector<8x96xf32>
    %92 = vector.extract_strided_slice %85 {offsets = [0, 96], sizes = [8, 32], strides = [1, 1]} : vector<8x128xf32> to vector<8x32xf32>
    %93 = math.tanh %92 : vector<8x32xf32>
    %94 = vector.extract_strided_slice %91 {offsets = [0, 0], sizes = [8, 32], strides = [1, 1]} : vector<8x96xf32> to vector<8x32xf32>
    %95 = vector.extract_strided_slice %91 {offsets = [0, 32], sizes = [8, 32], strides = [1, 1]} : vector<8x96xf32> to vector<8x32xf32>
    %96 = vector.extract_strided_slice %91 {offsets = [0, 64], sizes = [8, 32], strides = [1, 1]} : vector<8x96xf32> to vector<8x32xf32>
    %97 = arith.mulf %95, %77 : vector<8x32xf32>
    %98 = arith.mulf %94, %93 : vector<8x32xf32>
    %99 = arith.addf %97, %98 : vector<8x32xf32>
    %100 = math.tanh %99 : vector<8x32xf32>
    %101 = arith.mulf %96, %100 : vector<8x32xf32>
    %c4_i32 = arith.constant 4 : i32
    %c8_i32_31 = arith.constant 8 : i32
    %102 = arith.muli %c4_i32, %c8_i32_31 : i32
    %103 = tpu.assume_multiple %102, 8 : i32
    %104 = arith.index_cast %103 : i32 to index
    %c0_32 = arith.constant 0 : index
    %105 = vector.load %arg9[%104, %c0_32] : memref<64x128xf32, #tpu.memory_space<vmem>>, vector<8x128xf32>
    %cst_33 = arith.constant dense<0.000000e+00> : vector<8x128xf32>
    %106 = tpu.matmul %101, %11, %cst_33 {dimension_numbers = #tpu.dot_dimension_numbers<[1], [0], [0], [1], [0, 0, 1, 1], [], []>} : vector<8x32xf32>, vector<32x128xf32>, vector<8x128xf32> -> vector<8x128xf32>
    %107 = arith.addf %105, %106 : vector<8x128xf32>
    %108 = vector.extract_strided_slice %107 {offsets = [0, 0], sizes = [8, 96], strides = [1, 1]} : vector<8x128xf32> to vector<8x96xf32>
    %109 = arith.negf %108 : vector<8x96xf32>
    %110 = math.exp %109 : vector<8x96xf32>
    %cst_34 = arith.constant 1.000000e+00 : f32
    %111 = vector.broadcast %cst_34 : f32 to vector<8x96xf32>
    %112 = arith.addf %111, %110 : vector<8x96xf32>
    %113 = arith.divf %111, %112 : vector<8x96xf32>
    %114 = vector.extract_strided_slice %107 {offsets = [0, 96], sizes = [8, 32], strides = [1, 1]} : vector<8x128xf32> to vector<8x32xf32>
    %115 = math.tanh %114 : vector<8x32xf32>
    %116 = vector.extract_strided_slice %113 {offsets = [0, 0], sizes = [8, 32], strides = [1, 1]} : vector<8x96xf32> to vector<8x32xf32>
    %117 = vector.extract_strided_slice %113 {offsets = [0, 32], sizes = [8, 32], strides = [1, 1]} : vector<8x96xf32> to vector<8x32xf32>
    %118 = vector.extract_strided_slice %113 {offsets = [0, 64], sizes = [8, 32], strides = [1, 1]} : vector<8x96xf32> to vector<8x32xf32>
    %119 = arith.mulf %117, %99 : vector<8x32xf32>
    %120 = arith.mulf %116, %115 : vector<8x32xf32>
    %121 = arith.addf %119, %120 : vector<8x32xf32>
    %122 = math.tanh %121 : vector<8x32xf32>
    %123 = arith.mulf %118, %122 : vector<8x32xf32>
    %c5_i32 = arith.constant 5 : i32
    %c8_i32_35 = arith.constant 8 : i32
    %124 = arith.muli %c5_i32, %c8_i32_35 : i32
    %125 = tpu.assume_multiple %124, 8 : i32
    %126 = arith.index_cast %125 : i32 to index
    %c0_36 = arith.constant 0 : index
    %127 = vector.load %arg9[%126, %c0_36] : memref<64x128xf32, #tpu.memory_space<vmem>>, vector<8x128xf32>
    %cst_37 = arith.constant dense<0.000000e+00> : vector<8x128xf32>
    %128 = tpu.matmul %123, %11, %cst_37 {dimension_numbers = #tpu.dot_dimension_numbers<[1], [0], [0], [1], [0, 0, 1, 1], [], []>} : vector<8x32xf32>, vector<32x128xf32>, vector<8x128xf32> -> vector<8x128xf32>
    %129 = arith.addf %127, %128 : vector<8x128xf32>
    %130 = vector.extract_strided_slice %129 {offsets = [0, 0], sizes = [8, 96], strides = [1, 1]} : vector<8x128xf32> to vector<8x96xf32>
    %131 = arith.negf %130 : vector<8x96xf32>
    %132 = math.exp %131 : vector<8x96xf32>
    %cst_38 = arith.constant 1.000000e+00 : f32
    %133 = vector.broadcast %cst_38 : f32 to vector<8x96xf32>
    %134 = arith.addf %133, %132 : vector<8x96xf32>
    %135 = arith.divf %133, %134 : vector<8x96xf32>
    %136 = vector.extract_strided_slice %129 {offsets = [0, 96], sizes = [8, 32], strides = [1, 1]} : vector<8x128xf32> to vector<8x32xf32>
    %137 = math.tanh %136 : vector<8x32xf32>
    %138 = vector.extract_strided_slice %135 {offsets = [0, 0], sizes = [8, 32], strides = [1, 1]} : vector<8x96xf32> to vector<8x32xf32>
    %139 = vector.extract_strided_slice %135 {offsets = [0, 32], sizes = [8, 32], strides = [1, 1]} : vector<8x96xf32> to vector<8x32xf32>
    %140 = vector.extract_strided_slice %135 {offsets = [0, 64], sizes = [8, 32], strides = [1, 1]} : vector<8x96xf32> to vector<8x32xf32>
    %141 = arith.mulf %139, %121 : vector<8x32xf32>
    %142 = arith.mulf %138, %137 : vector<8x32xf32>
    %143 = arith.addf %141, %142 : vector<8x32xf32>
    %144 = math.tanh %143 : vector<8x32xf32>
    %145 = arith.mulf %140, %144 : vector<8x32xf32>
    %c6_i32 = arith.constant 6 : i32
    %c8_i32_39 = arith.constant 8 : i32
    %146 = arith.muli %c6_i32, %c8_i32_39 : i32
    %147 = tpu.assume_multiple %146, 8 : i32
    %148 = arith.index_cast %147 : i32 to index
    %c0_40 = arith.constant 0 : index
    %149 = vector.load %arg9[%148, %c0_40] : memref<64x128xf32, #tpu.memory_space<vmem>>, vector<8x128xf32>
    %cst_41 = arith.constant dense<0.000000e+00> : vector<8x128xf32>
    %150 = tpu.matmul %145, %11, %cst_41 {dimension_numbers = #tpu.dot_dimension_numbers<[1], [0], [0], [1], [0, 0, 1, 1], [], []>} : vector<8x32xf32>, vector<32x128xf32>, vector<8x128xf32> -> vector<8x128xf32>
    %151 = arith.addf %149, %150 : vector<8x128xf32>
    %152 = vector.extract_strided_slice %151 {offsets = [0, 0], sizes = [8, 96], strides = [1, 1]} : vector<8x128xf32> to vector<8x96xf32>
    %153 = arith.negf %152 : vector<8x96xf32>
    %154 = math.exp %153 : vector<8x96xf32>
    %cst_42 = arith.constant 1.000000e+00 : f32
    %155 = vector.broadcast %cst_42 : f32 to vector<8x96xf32>
    %156 = arith.addf %155, %154 : vector<8x96xf32>
    %157 = arith.divf %155, %156 : vector<8x96xf32>
    %158 = vector.extract_strided_slice %151 {offsets = [0, 96], sizes = [8, 32], strides = [1, 1]} : vector<8x128xf32> to vector<8x32xf32>
    %159 = math.tanh %158 : vector<8x32xf32>
    %160 = vector.extract_strided_slice %157 {offsets = [0, 0], sizes = [8, 32], strides = [1, 1]} : vector<8x96xf32> to vector<8x32xf32>
    %161 = vector.extract_strided_slice %157 {offsets = [0, 32], sizes = [8, 32], strides = [1, 1]} : vector<8x96xf32> to vector<8x32xf32>
    %162 = vector.extract_strided_slice %157 {offsets = [0, 64], sizes = [8, 32], strides = [1, 1]} : vector<8x96xf32> to vector<8x32xf32>
    %163 = arith.mulf %161, %143 : vector<8x32xf32>
    %164 = arith.mulf %160, %159 : vector<8x32xf32>
    %165 = arith.addf %163, %164 : vector<8x32xf32>
    %166 = math.tanh %165 : vector<8x32xf32>
    %167 = arith.mulf %162, %166 : vector<8x32xf32>
    %c7_i32 = arith.constant 7 : i32
    %c8_i32_43 = arith.constant 8 : i32
    %168 = arith.muli %c7_i32, %c8_i32_43 : i32
    %169 = tpu.assume_multiple %168, 8 : i32
    %170 = arith.index_cast %169 : i32 to index
    %c0_44 = arith.constant 0 : index
    %171 = vector.load %arg9[%170, %c0_44] : memref<64x128xf32, #tpu.memory_space<vmem>>, vector<8x128xf32>
    %cst_45 = arith.constant dense<0.000000e+00> : vector<8x128xf32>
    %172 = tpu.matmul %167, %11, %cst_45 {dimension_numbers = #tpu.dot_dimension_numbers<[1], [0], [0], [1], [0, 0, 1, 1], [], []>} : vector<8x32xf32>, vector<32x128xf32>, vector<8x128xf32> -> vector<8x128xf32>
    %173 = arith.addf %171, %172 : vector<8x128xf32>
    %174 = vector.extract_strided_slice %173 {offsets = [0, 0], sizes = [8, 96], strides = [1, 1]} : vector<8x128xf32> to vector<8x96xf32>
    %175 = arith.negf %174 : vector<8x96xf32>
    %176 = math.exp %175 : vector<8x96xf32>
    %cst_46 = arith.constant 1.000000e+00 : f32
    %177 = vector.broadcast %cst_46 : f32 to vector<8x96xf32>
    %178 = arith.addf %177, %176 : vector<8x96xf32>
    %179 = arith.divf %177, %178 : vector<8x96xf32>
    %180 = vector.extract_strided_slice %173 {offsets = [0, 96], sizes = [8, 32], strides = [1, 1]} : vector<8x128xf32> to vector<8x32xf32>
    %181 = math.tanh %180 : vector<8x32xf32>
    %182 = vector.extract_strided_slice %179 {offsets = [0, 0], sizes = [8, 32], strides = [1, 1]} : vector<8x96xf32> to vector<8x32xf32>
    %183 = vector.extract_strided_slice %179 {offsets = [0, 32], sizes = [8, 32], strides = [1, 1]} : vector<8x96xf32> to vector<8x32xf32>
    %184 = vector.extract_strided_slice %179 {offsets = [0, 64], sizes = [8, 32], strides = [1, 1]} : vector<8x96xf32> to vector<8x32xf32>
    %185 = arith.mulf %183, %165 : vector<8x32xf32>
    %186 = arith.mulf %182, %181 : vector<8x32xf32>
    %187 = arith.addf %185, %186 : vector<8x32xf32>
    %188 = math.tanh %187 : vector<8x32xf32>
    %189 = arith.mulf %184, %188 : vector<8x32xf32>
    %c8_i32_47 = arith.constant 8 : i32
    %c0_48 = arith.constant 0 : index
    %c0_49 = arith.constant 0 : index
    %190 = vector.load %arg10[%c0_48, %c0_49] : memref<8x32xf32, #tpu.memory_space<vmem>>, vector<8x32xf32>
    tpu.vector_store %arg10[%c0_48, %c0_49], %189 {strides = array<i32>} : memref<8x32xf32, #tpu.memory_space<vmem>>, vector<8x32xf32>,
    %c0_50 = arith.constant 0 : index
    %c0_51 = arith.constant 0 : index
    %191 = vector.load %arg11[%c0_50, %c0_51] : memref<8x32xf32, #tpu.memory_space<vmem>>, vector<8x32xf32>
    tpu.vector_store %arg11[%c0_50, %c0_51], %187 {strides = array<i32>} : memref<8x32xf32, #tpu.memory_space<vmem>>, vector<8x32xf32>,
    %c0_i32_52 = arith.constant 0 : i32
    %192 = arith.cmpi eq, %arg1, %c0_i32_52 : i32
    %193 = arith.extui %192 : i1 to i32
    %c0_i32_53 = arith.constant 0 : i32
    %194 = arith.cmpi ne, %193, %c0_i32_53 : i32
    scf.if %194 {
      %c0_54 = arith.constant 0 : index
      %c0_55 = arith.constant 0 : index
      %195 = vector.load %arg10[%c0_54, %c0_55] : memref<8x32xf32, #tpu.memory_space<vmem>>, vector<8x32xf32>
      %c0_56 = arith.constant 0 : index
      %c0_57 = arith.constant 0 : index
      %196 = vector.load %arg6[%c0_56, %c0_57] : memref<32x128xf32, #tpu.memory_space<vmem>>, vector<32x128xf32>
      %cst_58 = arith.constant dense<0.000000e+00> : vector<8x128xf32>
      %197 = tpu.matmul %195, %196, %cst_58 {dimension_numbers = #tpu.dot_dimension_numbers<[1], [0], [0], [1], [0, 0, 1, 1], [], []>} : vector<8x32xf32>, vector<32x128xf32>, vector<8x128xf32> -> vector<8x128xf32>
      %c0_59 = arith.constant 0 : index
      %c0_60 = arith.constant 0 : index
      %198 = vector.load %arg7[%c0_59, %c0_60] : memref<1x128xf32, #tpu.memory_space<vmem>>, vector<1x128xf32>
      %199 = vector.broadcast %198 : vector<1x128xf32> to vector<8x128xf32>
      %200 = arith.addf %197, %199 : vector<8x128xf32>
      %c0_61 = arith.constant 0 : index
      %c0_62 = arith.constant 0 : index
      %201 = vector.load %arg8[%c0_61, %c0_62] : memref<8x128xf32, #tpu.memory_space<vmem>>, vector<8x128xf32>
      tpu.vector_store %arg8[%c0_61, %c0_62], %200 {strides = array<i32>} : memref<8x128xf32, #tpu.memory_space<vmem>>, vector<8x128xf32>,
    } else {
    }
    return
  }
  func.func @transform_0(%arg0: i32, %arg1: i32) -> (i32, i32, i32) {
    %c0_i32 = arith.constant 0 : i32
    %c0_i32_0 = arith.constant 0 : i32
    return %arg1, %arg0, %c0_i32 : i32, i32, i32
  }
  func.func @transform_1(%arg0: i32, %arg1: i32) -> (i32, i32) {
    %c0_i32 = arith.constant 0 : i32
    %c0_i32_0 = arith.constant 0 : i32
    %c0_i32_1 = arith.constant 0 : i32
    return %c0_i32, %c0_i32_0 : i32, i32
  }
  func.func @transform_2(%arg0: i32, %arg1: i32) -> (i32, i32) {
    %c0_i32 = arith.constant 0 : i32
    %c0_i32_0 = arith.constant 0 : i32
    %c0_i32_1 = arith.constant 0 : i32
    return %c0_i32, %c0_i32_0 : i32, i32
  }
  func.func @transform_3(%arg0: i32, %arg1: i32) -> (i32, i32) {
    %c0_i32 = arith.constant 0 : i32
    %c0_i32_0 = arith.constant 0 : i32
    %c0_i32_1 = arith.constant 0 : i32
    return %c0_i32, %c0_i32_0 : i32, i32
  }
  func.func @transform_4(%arg0: i32, %arg1: i32) -> (i32, i32) {
    %c0_i32 = arith.constant 0 : i32
    %c0_i32_0 = arith.constant 0 : i32
    %c0_i32_1 = arith.constant 0 : i32
    return %c0_i32, %c0_i32_0 : i32, i32
  }
  func.func @transform_5(%arg0: i32, %arg1: i32) -> (i32, i32) {
    %c0_i32 = arith.constant 0 : i32
    %c0_i32_0 = arith.constant 0 : i32
    %c0_i32_1 = arith.constant 0 : i32
    return %c0_i32, %c0_i32_0 : i32, i32
  }
  func.func @transform_6(%arg0: i32, %arg1: i32) -> (i32, i32) {
    %c0_i32 = arith.constant 0 : i32
    %c0_i32_0 = arith.constant 0 : i32
    return %arg0, %c0_i32 : i32, i32
  }
}

module attributes {stable_mosaic.version = 11 : i64} {
  func.func @_lstm_kernel(%arg0: i32, %arg1: i32, %arg2: memref<8x8x5xf32, #tpu.memory_space<vmem>>, %arg3: memref<5x128xf32, #tpu.memory_space<vmem>>, %arg4: memref<1x128xf32, #tpu.memory_space<vmem>>, %arg5: memref<32x128xf32, #tpu.memory_space<vmem>>, %arg6: memref<32x128xf32, #tpu.memory_space<vmem>>, %arg7: memref<1x128xf32, #tpu.memory_space<vmem>>, %arg8: memref<8x128xf32, #tpu.memory_space<vmem>>, %arg9: memref<64x128xf32, #tpu.memory_space<vmem>>, %arg10: memref<8x32xf32, #tpu.memory_space<vmem>>, %arg11: memref<8x32xf32, #tpu.memory_space<vmem>>) attributes {dimension_semantics = [#tpu.dimension_semantics<parallel>, #tpu.dimension_semantics<arbitrary>], iteration_bounds = array<i64: 1, 1>, scalar_prefetch = 0 : i64, scratch_operands = 3 : i64, tpu.core_type = #tpu.core_type<tc>, window_params = [{transform_indices = @transform_0, window_bounds = array<i64: 8, 8, 5>}, {pipeline_mode = #tpu.pipeline_mode<synchronous>, transform_indices = @transform_1, window_bounds = array<i64: 5, 128>}, {pipeline_mode = #tpu.pipeline_mode<synchronous>, transform_indices = @transform_2, window_bounds = array<i64: 1, 128>}, {pipeline_mode = #tpu.pipeline_mode<synchronous>, transform_indices = @transform_3, window_bounds = array<i64: 32, 128>}, {pipeline_mode = #tpu.pipeline_mode<synchronous>, transform_indices = @transform_4, window_bounds = array<i64: 32, 128>}, {pipeline_mode = #tpu.pipeline_mode<synchronous>, transform_indices = @transform_5, window_bounds = array<i64: 1, 128>}, {transform_indices = @transform_6, window_bounds = array<i64: 8, 128>}]} {
    %c0_i32 = arith.constant 0 : i32
    %0 = arith.cmpi eq, %arg1, %c0_i32 : i32
    %1 = arith.extui %0 : i1 to i32
    %c0_i32_0 = arith.constant 0 : i32
    %2 = arith.cmpi ne, %1, %c0_i32_0 : i32
    scf.if %2 {
      %cst_54 = arith.constant 0.000000e+00 : f32
      %195 = vector.broadcast %cst_54 : f32 to vector<8x32xf32>
      %c0_55 = arith.constant 0 : index
      %c0_56 = arith.constant 0 : index
      %196 = vector.load %arg10[%c0_55, %c0_56] : memref<8x32xf32, #tpu.memory_space<vmem>>, vector<8x32xf32>
      tpu.vector_store %arg10[%c0_55, %c0_56], %195 {strides = array<i32>} : memref<8x32xf32, #tpu.memory_space<vmem>>, vector<8x32xf32>,
      %cst_57 = arith.constant 0.000000e+00 : f32
      %197 = vector.broadcast %cst_57 : f32 to vector<8x32xf32>
      %c0_58 = arith.constant 0 : index
      %c0_59 = arith.constant 0 : index
      %198 = vector.load %arg11[%c0_58, %c0_59] : memref<8x32xf32, #tpu.memory_space<vmem>>, vector<8x32xf32>
      tpu.vector_store %arg11[%c0_58, %c0_59], %197 {strides = array<i32>} : memref<8x32xf32, #tpu.memory_space<vmem>>, vector<8x32xf32>,
    } else {
    }
    %c0 = arith.constant 0 : index
    %c0_1 = arith.constant 0 : index
    %c0_2 = arith.constant 0 : index
    %3 = vector.load %arg2[%c0, %c0_1, %c0_2] : memref<8x8x5xf32, #tpu.memory_space<vmem>>, vector<8x8x5xf32>
    %4 = vector.shape_cast %3 : vector<8x8x5xf32> to vector<64x5xf32>
    %c0_3 = arith.constant 0 : index
    %c0_4 = arith.constant 0 : index
    %5 = vector.load %arg3[%c0_3, %c0_4] : memref<5x128xf32, #tpu.memory_space<vmem>>, vector<5x128xf32>
    %cst = arith.constant dense<0.000000e+00> : vector<64x128xf32>
    %6 = tpu.matmul %4, %5, %cst {dimension_numbers = #tpu.dot_dimension_numbers<[1], [0], [0], [1], [0, 0, 1, 1], [], []>} : vector<64x5xf32>, vector<5x128xf32>, vector<64x128xf32> -> vector<64x128xf32>
    %c0_5 = arith.constant 0 : index
    %c0_6 = arith.constant 0 : index
    %7 = vector.load %arg4[%c0_5, %c0_6] : memref<1x128xf32, #tpu.memory_space<vmem>>, vector<1x128xf32>
    %8 = vector.broadcast %7 : vector<1x128xf32> to vector<64x128xf32>
    %9 = arith.addf %6, %8 : vector<64x128xf32>
    %c0_7 = arith.constant 0 : index
    %c0_8 = arith.constant 0 : index
    %10 = vector.load %arg9[%c0_7, %c0_8] : memref<64x128xf32, #tpu.memory_space<vmem>>, vector<64x128xf32>
    tpu.vector_store %arg9[%c0_7, %c0_8], %9 {strides = array<i32>} : memref<64x128xf32, #tpu.memory_space<vmem>>, vector<64x128xf32>,
    %c0_9 = arith.constant 0 : index
    %c0_10 = arith.constant 0 : index
    %11 = vector.load %arg5[%c0_9, %c0_10] : memref<32x128xf32, #tpu.memory_space<vmem>>, vector<32x128xf32>
    %c0_11 = arith.constant 0 : index
    %c0_12 = arith.constant 0 : index
    %12 = vector.load %arg10[%c0_11, %c0_12] : memref<8x32xf32, #tpu.memory_space<vmem>>, vector<8x32xf32>
    %c0_13 = arith.constant 0 : index
    %c0_14 = arith.constant 0 : index
    %13 = vector.load %arg11[%c0_13, %c0_14] : memref<8x32xf32, #tpu.memory_space<vmem>>, vector<8x32xf32>
    %c0_i32_15 = arith.constant 0 : i32
    %c8_i32 = arith.constant 8 : i32
    %14 = arith.muli %c0_i32_15, %c8_i32 : i32
    %15 = tpu.assume_multiple %14, 8 : i32
    %16 = arith.index_cast %15 : i32 to index
    %c0_16 = arith.constant 0 : index
    %17 = vector.load %arg9[%16, %c0_16] : memref<64x128xf32, #tpu.memory_space<vmem>>, vector<8x128xf32>
    %cst_17 = arith.constant dense<0.000000e+00> : vector<8x128xf32>
    %18 = tpu.matmul %12, %11, %cst_17 {dimension_numbers = #tpu.dot_dimension_numbers<[1], [0], [0], [1], [0, 0, 1, 1], [], []>} : vector<8x32xf32>, vector<32x128xf32>, vector<8x128xf32> -> vector<8x128xf32>
    %19 = arith.addf %17, %18 : vector<8x128xf32>
    %20 = vector.extract_strided_slice %19 {offsets = [0, 0], sizes = [8, 96], strides = [1, 1]} : vector<8x128xf32> to vector<8x96xf32>
    %21 = arith.negf %20 : vector<8x96xf32>
    %22 = math.exp %21 : vector<8x96xf32>
    %cst_18 = arith.constant 1.000000e+00 : f32
    %23 = vector.broadcast %cst_18 : f32 to vector<8x96xf32>
    %24 = arith.addf %23, %22 : vector<8x96xf32>
    %25 = arith.divf %23, %24 : vector<8x96xf32>
    %26 = vector.extract_strided_slice %19 {offsets = [0, 96], sizes = [8, 32], strides = [1, 1]} : vector<8x128xf32> to vector<8x32xf32>
    %27 = math.tanh %26 : vector<8x32xf32>
    %28 = vector.extract_strided_slice %25 {offsets = [0, 0], sizes = [8, 32], strides = [1, 1]} : vector<8x96xf32> to vector<8x32xf32>
    %29 = vector.extract_strided_slice %25 {offsets = [0, 32], sizes = [8, 32], strides = [1, 1]} : vector<8x96xf32> to vector<8x32xf32>
    %30 = vector.extract_strided_slice %25 {offsets = [0, 64], sizes = [8, 32], strides = [1, 1]} : vector<8x96xf32> to vector<8x32xf32>
    %31 = arith.mulf %29, %13 : vector<8x32xf32>
    %32 = arith.mulf %28, %27 : vector<8x32xf32>
    %33 = arith.addf %31, %32 : vector<8x32xf32>
    %34 = math.tanh %33 : vector<8x32xf32>
    %35 = arith.mulf %30, %34 : vector<8x32xf32>
    %c1_i32 = arith.constant 1 : i32
    %c8_i32_19 = arith.constant 8 : i32
    %36 = arith.muli %c1_i32, %c8_i32_19 : i32
    %37 = tpu.assume_multiple %36, 8 : i32
    %38 = arith.index_cast %37 : i32 to index
    %c0_20 = arith.constant 0 : index
    %39 = vector.load %arg9[%38, %c0_20] : memref<64x128xf32, #tpu.memory_space<vmem>>, vector<8x128xf32>
    %cst_21 = arith.constant dense<0.000000e+00> : vector<8x128xf32>
    %40 = tpu.matmul %35, %11, %cst_21 {dimension_numbers = #tpu.dot_dimension_numbers<[1], [0], [0], [1], [0, 0, 1, 1], [], []>} : vector<8x32xf32>, vector<32x128xf32>, vector<8x128xf32> -> vector<8x128xf32>
    %41 = arith.addf %39, %40 : vector<8x128xf32>
    %42 = vector.extract_strided_slice %41 {offsets = [0, 0], sizes = [8, 96], strides = [1, 1]} : vector<8x128xf32> to vector<8x96xf32>
    %43 = arith.negf %42 : vector<8x96xf32>
    %44 = math.exp %43 : vector<8x96xf32>
    %cst_22 = arith.constant 1.000000e+00 : f32
    %45 = vector.broadcast %cst_22 : f32 to vector<8x96xf32>
    %46 = arith.addf %45, %44 : vector<8x96xf32>
    %47 = arith.divf %45, %46 : vector<8x96xf32>
    %48 = vector.extract_strided_slice %41 {offsets = [0, 96], sizes = [8, 32], strides = [1, 1]} : vector<8x128xf32> to vector<8x32xf32>
    %49 = math.tanh %48 : vector<8x32xf32>
    %50 = vector.extract_strided_slice %47 {offsets = [0, 0], sizes = [8, 32], strides = [1, 1]} : vector<8x96xf32> to vector<8x32xf32>
    %51 = vector.extract_strided_slice %47 {offsets = [0, 32], sizes = [8, 32], strides = [1, 1]} : vector<8x96xf32> to vector<8x32xf32>
    %52 = vector.extract_strided_slice %47 {offsets = [0, 64], sizes = [8, 32], strides = [1, 1]} : vector<8x96xf32> to vector<8x32xf32>
    %53 = arith.mulf %51, %33 : vector<8x32xf32>
    %54 = arith.mulf %50, %49 : vector<8x32xf32>
    %55 = arith.addf %53, %54 : vector<8x32xf32>
    %56 = math.tanh %55 : vector<8x32xf32>
    %57 = arith.mulf %52, %56 : vector<8x32xf32>
    %c2_i32 = arith.constant 2 : i32
    %c8_i32_23 = arith.constant 8 : i32
    %58 = arith.muli %c2_i32, %c8_i32_23 : i32
    %59 = tpu.assume_multiple %58, 8 : i32
    %60 = arith.index_cast %59 : i32 to index
    %c0_24 = arith.constant 0 : index
    %61 = vector.load %arg9[%60, %c0_24] : memref<64x128xf32, #tpu.memory_space<vmem>>, vector<8x128xf32>
    %cst_25 = arith.constant dense<0.000000e+00> : vector<8x128xf32>
    %62 = tpu.matmul %57, %11, %cst_25 {dimension_numbers = #tpu.dot_dimension_numbers<[1], [0], [0], [1], [0, 0, 1, 1], [], []>} : vector<8x32xf32>, vector<32x128xf32>, vector<8x128xf32> -> vector<8x128xf32>
    %63 = arith.addf %61, %62 : vector<8x128xf32>
    %64 = vector.extract_strided_slice %63 {offsets = [0, 0], sizes = [8, 96], strides = [1, 1]} : vector<8x128xf32> to vector<8x96xf32>
    %65 = arith.negf %64 : vector<8x96xf32>
    %66 = math.exp %65 : vector<8x96xf32>
    %cst_26 = arith.constant 1.000000e+00 : f32
    %67 = vector.broadcast %cst_26 : f32 to vector<8x96xf32>
    %68 = arith.addf %67, %66 : vector<8x96xf32>
    %69 = arith.divf %67, %68 : vector<8x96xf32>
    %70 = vector.extract_strided_slice %63 {offsets = [0, 96], sizes = [8, 32], strides = [1, 1]} : vector<8x128xf32> to vector<8x32xf32>
    %71 = math.tanh %70 : vector<8x32xf32>
    %72 = vector.extract_strided_slice %69 {offsets = [0, 0], sizes = [8, 32], strides = [1, 1]} : vector<8x96xf32> to vector<8x32xf32>
    %73 = vector.extract_strided_slice %69 {offsets = [0, 32], sizes = [8, 32], strides = [1, 1]} : vector<8x96xf32> to vector<8x32xf32>
    %74 = vector.extract_strided_slice %69 {offsets = [0, 64], sizes = [8, 32], strides = [1, 1]} : vector<8x96xf32> to vector<8x32xf32>
    %75 = arith.mulf %73, %55 : vector<8x32xf32>
    %76 = arith.mulf %72, %71 : vector<8x32xf32>
    %77 = arith.addf %75, %76 : vector<8x32xf32>
    %78 = math.tanh %77 : vector<8x32xf32>
    %79 = arith.mulf %74, %78 : vector<8x32xf32>
    %c3_i32 = arith.constant 3 : i32
    %c8_i32_27 = arith.constant 8 : i32
    %80 = arith.muli %c3_i32, %c8_i32_27 : i32
    %81 = tpu.assume_multiple %80, 8 : i32
    %82 = arith.index_cast %81 : i32 to index
    %c0_28 = arith.constant 0 : index
    %83 = vector.load %arg9[%82, %c0_28] : memref<64x128xf32, #tpu.memory_space<vmem>>, vector<8x128xf32>
    %cst_29 = arith.constant dense<0.000000e+00> : vector<8x128xf32>
    %84 = tpu.matmul %79, %11, %cst_29 {dimension_numbers = #tpu.dot_dimension_numbers<[1], [0], [0], [1], [0, 0, 1, 1], [], []>} : vector<8x32xf32>, vector<32x128xf32>, vector<8x128xf32> -> vector<8x128xf32>
    %85 = arith.addf %83, %84 : vector<8x128xf32>
    %86 = vector.extract_strided_slice %85 {offsets = [0, 0], sizes = [8, 96], strides = [1, 1]} : vector<8x128xf32> to vector<8x96xf32>
    %87 = arith.negf %86 : vector<8x96xf32>
    %88 = math.exp %87 : vector<8x96xf32>
    %cst_30 = arith.constant 1.000000e+00 : f32
    %89 = vector.broadcast %cst_30 : f32 to vector<8x96xf32>
    %90 = arith.addf %89, %88 : vector<8x96xf32>
    %91 = arith.divf %89, %90 : vector<8x96xf32>
    %92 = vector.extract_strided_slice %85 {offsets = [0, 96], sizes = [8, 32], strides = [1, 1]} : vector<8x128xf32> to vector<8x32xf32>
    %93 = math.tanh %92 : vector<8x32xf32>
    %94 = vector.extract_strided_slice %91 {offsets = [0, 0], sizes = [8, 32], strides = [1, 1]} : vector<8x96xf32> to vector<8x32xf32>
    %95 = vector.extract_strided_slice %91 {offsets = [0, 32], sizes = [8, 32], strides = [1, 1]} : vector<8x96xf32> to vector<8x32xf32>
    %96 = vector.extract_strided_slice %91 {offsets = [0, 64], sizes = [8, 32], strides = [1, 1]} : vector<8x96xf32> to vector<8x32xf32>
    %97 = arith.mulf %95, %77 : vector<8x32xf32>
    %98 = arith.mulf %94, %93 : vector<8x32xf32>
    %99 = arith.addf %97, %98 : vector<8x32xf32>
    %100 = math.tanh %99 : vector<8x32xf32>
    %101 = arith.mulf %96, %100 : vector<8x32xf32>
    %c4_i32 = arith.constant 4 : i32
    %c8_i32_31 = arith.constant 8 : i32
    %102 = arith.muli %c4_i32, %c8_i32_31 : i32
    %103 = tpu.assume_multiple %102, 8 : i32
    %104 = arith.index_cast %103 : i32 to index
    %c0_32 = arith.constant 0 : index
    %105 = vector.load %arg9[%104, %c0_32] : memref<64x128xf32, #tpu.memory_space<vmem>>, vector<8x128xf32>
    %cst_33 = arith.constant dense<0.000000e+00> : vector<8x128xf32>
    %106 = tpu.matmul %101, %11, %cst_33 {dimension_numbers = #tpu.dot_dimension_numbers<[1], [0], [0], [1], [0, 0, 1, 1], [], []>} : vector<8x32xf32>, vector<32x128xf32>, vector<8x128xf32> -> vector<8x128xf32>
    %107 = arith.addf %105, %106 : vector<8x128xf32>
    %108 = vector.extract_strided_slice %107 {offsets = [0, 0], sizes = [8, 96], strides = [1, 1]} : vector<8x128xf32> to vector<8x96xf32>
    %109 = arith.negf %108 : vector<8x96xf32>
    %110 = math.exp %109 : vector<8x96xf32>
    %cst_34 = arith.constant 1.000000e+00 : f32
    %111 = vector.broadcast %cst_34 : f32 to vector<8x96xf32>
    %112 = arith.addf %111, %110 : vector<8x96xf32>
    %113 = arith.divf %111, %112 : vector<8x96xf32>
    %114 = vector.extract_strided_slice %107 {offsets = [0, 96], sizes = [8, 32], strides = [1, 1]} : vector<8x128xf32> to vector<8x32xf32>
    %115 = math.tanh %114 : vector<8x32xf32>
    %116 = vector.extract_strided_slice %113 {offsets = [0, 0], sizes = [8, 32], strides = [1, 1]} : vector<8x96xf32> to vector<8x32xf32>
    %117 = vector.extract_strided_slice %113 {offsets = [0, 32], sizes = [8, 32], strides = [1, 1]} : vector<8x96xf32> to vector<8x32xf32>
    %118 = vector.extract_strided_slice %113 {offsets = [0, 64], sizes = [8, 32], strides = [1, 1]} : vector<8x96xf32> to vector<8x32xf32>
    %119 = arith.mulf %117, %99 : vector<8x32xf32>
    %120 = arith.mulf %116, %115 : vector<8x32xf32>
    %121 = arith.addf %119, %120 : vector<8x32xf32>
    %122 = math.tanh %121 : vector<8x32xf32>
    %123 = arith.mulf %118, %122 : vector<8x32xf32>
    %c5_i32 = arith.constant 5 : i32
    %c8_i32_35 = arith.constant 8 : i32
    %124 = arith.muli %c5_i32, %c8_i32_35 : i32
    %125 = tpu.assume_multiple %124, 8 : i32
    %126 = arith.index_cast %125 : i32 to index
    %c0_36 = arith.constant 0 : index
    %127 = vector.load %arg9[%126, %c0_36] : memref<64x128xf32, #tpu.memory_space<vmem>>, vector<8x128xf32>
    %cst_37 = arith.constant dense<0.000000e+00> : vector<8x128xf32>
    %128 = tpu.matmul %123, %11, %cst_37 {dimension_numbers = #tpu.dot_dimension_numbers<[1], [0], [0], [1], [0, 0, 1, 1], [], []>} : vector<8x32xf32>, vector<32x128xf32>, vector<8x128xf32> -> vector<8x128xf32>
    %129 = arith.addf %127, %128 : vector<8x128xf32>
    %130 = vector.extract_strided_slice %129 {offsets = [0, 0], sizes = [8, 96], strides = [1, 1]} : vector<8x128xf32> to vector<8x96xf32>
    %131 = arith.negf %130 : vector<8x96xf32>
    %132 = math.exp %131 : vector<8x96xf32>
    %cst_38 = arith.constant 1.000000e+00 : f32
    %133 = vector.broadcast %cst_38 : f32 to vector<8x96xf32>
    %134 = arith.addf %133, %132 : vector<8x96xf32>
    %135 = arith.divf %133, %134 : vector<8x96xf32>
    %136 = vector.extract_strided_slice %129 {offsets = [0, 96], sizes = [8, 32], strides = [1, 1]} : vector<8x128xf32> to vector<8x32xf32>
    %137 = math.tanh %136 : vector<8x32xf32>
    %138 = vector.extract_strided_slice %135 {offsets = [0, 0], sizes = [8, 32], strides = [1, 1]} : vector<8x96xf32> to vector<8x32xf32>
    %139 = vector.extract_strided_slice %135 {offsets = [0, 32], sizes = [8, 32], strides = [1, 1]} : vector<8x96xf32> to vector<8x32xf32>
    %140 = vector.extract_strided_slice %135 {offsets = [0, 64], sizes = [8, 32], strides = [1, 1]} : vector<8x96xf32> to vector<8x32xf32>
    %141 = arith.mulf %139, %121 : vector<8x32xf32>
    %142 = arith.mulf %138, %137 : vector<8x32xf32>
    %143 = arith.addf %141, %142 : vector<8x32xf32>
    %144 = math.tanh %143 : vector<8x32xf32>
    %145 = arith.mulf %140, %144 : vector<8x32xf32>
    %c6_i32 = arith.constant 6 : i32
    %c8_i32_39 = arith.constant 8 : i32
    %146 = arith.muli %c6_i32, %c8_i32_39 : i32
    %147 = tpu.assume_multiple %146, 8 : i32
    %148 = arith.index_cast %147 : i32 to index
    %c0_40 = arith.constant 0 : index
    %149 = vector.load %arg9[%148, %c0_40] : memref<64x128xf32, #tpu.memory_space<vmem>>, vector<8x128xf32>
    %cst_41 = arith.constant dense<0.000000e+00> : vector<8x128xf32>
    %150 = tpu.matmul %145, %11, %cst_41 {dimension_numbers = #tpu.dot_dimension_numbers<[1], [0], [0], [1], [0, 0, 1, 1], [], []>} : vector<8x32xf32>, vector<32x128xf32>, vector<8x128xf32> -> vector<8x128xf32>
    %151 = arith.addf %149, %150 : vector<8x128xf32>
    %152 = vector.extract_strided_slice %151 {offsets = [0, 0], sizes = [8, 96], strides = [1, 1]} : vector<8x128xf32> to vector<8x96xf32>
    %153 = arith.negf %152 : vector<8x96xf32>
    %154 = math.exp %153 : vector<8x96xf32>
    %cst_42 = arith.constant 1.000000e+00 : f32
    %155 = vector.broadcast %cst_42 : f32 to vector<8x96xf32>
    %156 = arith.addf %155, %154 : vector<8x96xf32>
    %157 = arith.divf %155, %156 : vector<8x96xf32>
    %158 = vector.extract_strided_slice %151 {offsets = [0, 96], sizes = [8, 32], strides = [1, 1]} : vector<8x128xf32> to vector<8x32xf32>
    %159 = math.tanh %158 : vector<8x32xf32>
    %160 = vector.extract_strided_slice %157 {offsets = [0, 0], sizes = [8, 32], strides = [1, 1]} : vector<8x96xf32> to vector<8x32xf32>
    %161 = vector.extract_strided_slice %157 {offsets = [0, 32], sizes = [8, 32], strides = [1, 1]} : vector<8x96xf32> to vector<8x32xf32>
    %162 = vector.extract_strided_slice %157 {offsets = [0, 64], sizes = [8, 32], strides = [1, 1]} : vector<8x96xf32> to vector<8x32xf32>
    %163 = arith.mulf %161, %143 : vector<8x32xf32>
    %164 = arith.mulf %160, %159 : vector<8x32xf32>
    %165 = arith.addf %163, %164 : vector<8x32xf32>
    %166 = math.tanh %165 : vector<8x32xf32>
    %167 = arith.mulf %162, %166 : vector<8x32xf32>
    %c7_i32 = arith.constant 7 : i32
    %c8_i32_43 = arith.constant 8 : i32
    %168 = arith.muli %c7_i32, %c8_i32_43 : i32
    %169 = tpu.assume_multiple %168, 8 : i32
    %170 = arith.index_cast %169 : i32 to index
    %c0_44 = arith.constant 0 : index
    %171 = vector.load %arg9[%170, %c0_44] : memref<64x128xf32, #tpu.memory_space<vmem>>, vector<8x128xf32>
    %cst_45 = arith.constant dense<0.000000e+00> : vector<8x128xf32>
    %172 = tpu.matmul %167, %11, %cst_45 {dimension_numbers = #tpu.dot_dimension_numbers<[1], [0], [0], [1], [0, 0, 1, 1], [], []>} : vector<8x32xf32>, vector<32x128xf32>, vector<8x128xf32> -> vector<8x128xf32>
    %173 = arith.addf %171, %172 : vector<8x128xf32>
    %174 = vector.extract_strided_slice %173 {offsets = [0, 0], sizes = [8, 96], strides = [1, 1]} : vector<8x128xf32> to vector<8x96xf32>
    %175 = arith.negf %174 : vector<8x96xf32>
    %176 = math.exp %175 : vector<8x96xf32>
    %cst_46 = arith.constant 1.000000e+00 : f32
    %177 = vector.broadcast %cst_46 : f32 to vector<8x96xf32>
    %178 = arith.addf %177, %176 : vector<8x96xf32>
    %179 = arith.divf %177, %178 : vector<8x96xf32>
    %180 = vector.extract_strided_slice %173 {offsets = [0, 96], sizes = [8, 32], strides = [1, 1]} : vector<8x128xf32> to vector<8x32xf32>
    %181 = math.tanh %180 : vector<8x32xf32>
    %182 = vector.extract_strided_slice %179 {offsets = [0, 0], sizes = [8, 32], strides = [1, 1]} : vector<8x96xf32> to vector<8x32xf32>
    %183 = vector.extract_strided_slice %179 {offsets = [0, 32], sizes = [8, 32], strides = [1, 1]} : vector<8x96xf32> to vector<8x32xf32>
    %184 = vector.extract_strided_slice %179 {offsets = [0, 64], sizes = [8, 32], strides = [1, 1]} : vector<8x96xf32> to vector<8x32xf32>
    %185 = arith.mulf %183, %165 : vector<8x32xf32>
    %186 = arith.mulf %182, %181 : vector<8x32xf32>
    %187 = arith.addf %185, %186 : vector<8x32xf32>
    %188 = math.tanh %187 : vector<8x32xf32>
    %189 = arith.mulf %184, %188 : vector<8x32xf32>
    %c8_i32_47 = arith.constant 8 : i32
    %c0_48 = arith.constant 0 : index
    %c0_49 = arith.constant 0 : index
    %190 = vector.load %arg10[%c0_48, %c0_49] : memref<8x32xf32, #tpu.memory_space<vmem>>, vector<8x32xf32>
    tpu.vector_store %arg10[%c0_48, %c0_49], %189 {strides = array<i32>} : memref<8x32xf32, #tpu.memory_space<vmem>>, vector<8x32xf32>,
    %c0_50 = arith.constant 0 : index
    %c0_51 = arith.constant 0 : index
    %191 = vector.load %arg11[%c0_50, %c0_51] : memref<8x32xf32, #tpu.memory_space<vmem>>, vector<8x32xf32>
    tpu.vector_store %arg11[%c0_50, %c0_51], %187 {strides = array<i32>} : memref<8x32xf32, #tpu.memory_space<vmem>>, vector<8x32xf32>,
    %c0_i32_52 = arith.constant 0 : i32
    %192 = arith.cmpi eq, %arg1, %c0_i32_52 : i32
    %193 = arith.extui %192 : i1 to i32
    %c0_i32_53 = arith.constant 0 : i32
    %194 = arith.cmpi ne, %193, %c0_i32_53 : i32
    scf.if %194 {
      %c0_54 = arith.constant 0 : index
      %c0_55 = arith.constant 0 : index
      %195 = vector.load %arg10[%c0_54, %c0_55] : memref<8x32xf32, #tpu.memory_space<vmem>>, vector<8x32xf32>
      %c0_56 = arith.constant 0 : index
      %c0_57 = arith.constant 0 : index
      %196 = vector.load %arg6[%c0_56, %c0_57] : memref<32x128xf32, #tpu.memory_space<vmem>>, vector<32x128xf32>
      %cst_58 = arith.constant dense<0.000000e+00> : vector<8x128xf32>
      %197 = tpu.matmul %195, %196, %cst_58 {dimension_numbers = #tpu.dot_dimension_numbers<[1], [0], [0], [1], [0, 0, 1, 1], [], []>} : vector<8x32xf32>, vector<32x128xf32>, vector<8x128xf32> -> vector<8x128xf32>
      %c0_59 = arith.constant 0 : index
      %c0_60 = arith.constant 0 : index
      %198 = vector.load %arg7[%c0_59, %c0_60] : memref<1x128xf32, #tpu.memory_space<vmem>>, vector<1x128xf32>
      %199 = vector.broadcast %198 : vector<1x128xf32> to vector<8x128xf32>
      %200 = arith.addf %197, %199 : vector<8x128xf32>
      %c0_61 = arith.constant 0 : index
      %c0_62 = arith.constant 0 : index
      %201 = vector.load %arg8[%c0_61, %c0_62] : memref<8x128xf32, #tpu.memory_space<vmem>>, vector<8x128xf32>
      tpu.vector_store %arg8[%c0_61, %c0_62], %200 {strides = array<i32>} : memref<8x128xf32, #tpu.memory_space<vmem>>, vector<8x128xf32>,
    } else {
    }
    return
  }
  func.func @transform_0(%arg0: i32, %arg1: i32) -> (i32, i32, i32) {
    %c0_i32 = arith.constant 0 : i32
    %c0_i32_0 = arith.constant 0 : i32
    return %arg1, %arg0, %c0_i32 : i32, i32, i32
  }
  func.func @transform_1(%arg0: i32, %arg1: i32) -> (i32, i32) {
    %c0_i32 = arith.constant 0 : i32
    %c0_i32_0 = arith.constant 0 : i32
    %c0_i32_1 = arith.constant 0 : i32
    return %c0_i32, %c0_i32_0 : i32, i32
  }
  func.func @transform_2(%arg0: i32, %arg1: i32) -> (i32, i32) {
    %c0_i32 = arith.constant 0 : i32
    %c0_i32_0 = arith.constant 0 : i32
    %c0_i32_1 = arith.constant 0 : i32
    return %c0_i32, %c0_i32_0 : i32, i32
  }
  func.func @transform_3(%arg0: i32, %arg1: i32) -> (i32, i32) {
    %c0_i32 = arith.constant 0 : i32
    %c0_i32_0 = arith.constant 0 : i32
    %c0_i32_1 = arith.constant 0 : i32
    return %c0_i32, %c0_i32_0 : i32, i32
  }
  func.func @transform_4(%arg0: i32, %arg1: i32) -> (i32, i32) {
    %c0_i32 = arith.constant 0 : i32
    %c0_i32_0 = arith.constant 0 : i32
    %c0_i32_1 = arith.constant 0 : i32
    return %c0_i32, %c0_i32_0 : i32, i32
  }
  func.func @transform_5(%arg0: i32, %arg1: i32) -> (i32, i32) {
    %c0_i32 = arith.constant 0 : i32
    %c0_i32_0 = arith.constant 0 : i32
    %c0_i32_1 = arith.constant 0 : i32
    return %c0_i32, %c0_i32_0 : i32, i32
  }
  func.func @transform_6(%arg0: i32, %arg1: i32) -> (i32, i32) {
    %c0_i32 = arith.constant 0 : i32
    %c0_i32_0 = arith.constant 0 : i32
    return %arg0, %c0_i32 : i32, i32
  }
}

</mosaic_0001>

<llo_original>
// kernel: _forward_jit.1
$region0: #{_forward_jit.1}
  #allocation0 [shape = 'u32[]', space=smem, size = 0x4, offset = 0x4, fixed_abs, tag = 'smem constant byte address 0x4 - core index']
  #allocation1 [shape = 'u32[144,128]{1,0:T(1,128)}', space=vmem, size = 0x12000, scoped, tag = 'internal scratch']
  #allocation2 [shape = 'f32[64,128]{1,0:T(8,128)}', space=vmem, size = 0x8000, scoped, tag = 'scratch operand']
  #allocation3 [shape = 'f32[8,32]{1,0:T(8,128)}', space=vmem, size = 0x1000, scoped, tag = 'scratch operand']
  #allocation4 [shape = 'f32[8,32]{1,0:T(8,128)}', space=vmem, size = 0x1000, scoped, tag = 'scratch operand']
  %s0 = inlined_call_operand.vmem [shape: f32[8,8,5], index: 0, kind: input, shape index: {}]
  %s1 = inlined_call_operand.vmem [shape: f32[5,128], index: 1, kind: input, shape index: {}]
  %s2 = inlined_call_operand.vmem [shape: f32[1,128], index: 2, kind: input, shape index: {}]
  %s3 = inlined_call_operand.vmem [shape: f32[32,128], index: 3, kind: input, shape index: {}]
  %s4 = inlined_call_operand.vmem [shape: f32[32,128], index: 4, kind: input, shape index: {}]
  %s5 = inlined_call_operand.vmem [shape: f32[1,128], index: 5, kind: input, shape index: {}]
  %s6 = inlined_call_operand.vmem [shape: f32[8,128], index: 6, kind: output, shape index: {}]
  %s7 = sld [smem:[#allocation0]]
  $region42: #{_forward_jit.1} parent=0
    _
  %s9 = ssub.s32 1, %s7
  %s10 = scalar_select 0, %s9, %s7
  // Predicated region
  $region2: #{_forward_jit.1} parent=0 // pred_check
    _
  $region3: #{_forward_jit.1} parent=0 // pred_check_branch
    %12 = sbr.rel (0) target = $region5
  $region4: #{_forward_jit.1} parent=0 // pred_region
    _
  $region5: #{_forward_jit.1} parent=0 // pred_fallthru
    _
  // Predicated region
  $region6: #{_forward_jit.1} parent=0 // pred_check
    _
  $region7: #{_forward_jit.1} parent=0 // pred_check_branch
    %14 = sbr.rel (0) target = $region9
  $region8: #{_forward_jit.1} parent=0 // pred_region
    _
  $region9: #{_forward_jit.1} parent=0 // pred_fallthru
    _
  // Predicated region
  $region10: #{_forward_jit.1} parent=0 // pred_check
    _
  $region11: #{_forward_jit.1} parent=0 // pred_check_branch
    %16 = sbr.rel (0) target = $region13
  $region12: #{_forward_jit.1} parent=0 // pred_region
    _
  $region13: #{_forward_jit.1} parent=0 // pred_fallthru
    _
  // Predicated region
  $region14: #{_forward_jit.1} parent=0 // pred_check
    _
  $region15: #{_forward_jit.1} parent=0 // pred_check_branch
    %18 = sbr.rel (0) target = $region17
  $region16: #{_forward_jit.1} parent=0 // pred_region
    _
  $region17: #{_forward_jit.1} parent=0 // pred_fallthru
    _
  // Predicated region
  $region18: #{_forward_jit.1} parent=0 // pred_check
    _
  $region19: #{_forward_jit.1} parent=0 // pred_check_branch
    %20 = sbr.rel (0) target = $region21
  $region20: #{_forward_jit.1} parent=0 // pred_region
    _
  $region21: #{_forward_jit.1} parent=0 // pred_fallthru
    _
  // Predicated region
  $region22: #{_forward_jit.1} parent=0 // pred_check
    _
  $region23: #{_forward_jit.1} parent=0 // pred_check_branch
    %22 = sbr.rel (0) target = $region25
  $region24: #{_forward_jit.1} parent=0 // pred_region
    _
  $region25: #{_forward_jit.1} parent=0 // pred_fallthru
    _
  %p23 = scmp.eq.s32.totalorder 0, 0
  // Predicated region
  $region26: #{_forward_jit.1} parent=0 // pred_check
    %p24 = pneg %p23
  $region27: #{_forward_jit.1} parent=0 // pred_check_branch
    %26 = sbr.rel (%p24) target = $region29
  $region28: #{_forward_jit.1} parent=0 // pred_region
    %vm27 = vcmask 261120
    %28 = vst.msk [vmem:[#allocation3] sm:$0xff] %vm27, 0.0
    %29 = vst.msk [vmem:[#allocation4] sm:$0xff] %vm27, 0.0
  $region29: #{_forward_jit.1} parent=0 // pred_fallthru
    _
  %v30 = vld [vmem:[%s0] sm:$0xff]
  %v31 = vld [vmem:[%s0 + $0x8] sm:$0xff]
  %v32 = vld [vmem:[%s0 + $0x10] sm:$0xff]
  %v33 = vld [vmem:[%s0 + $0x18] sm:$0xff]
  %v34 = vld [vmem:[%s0 + $0x20] sm:$0xff]
  %v35 = vld [vmem:[%s0 + $0x28] sm:$0xff]
  %v36 = vld [vmem:[%s0 + $0x30] sm:$0xff]
  %v37 = vld [vmem:[%s0 + $0x38] sm:$0xff]
  %v38 = vld [vmem:[%s1] sm:$0x1f]
  %v39 = vld [vmem:[%s2] sm:$0x1]
  %v41 = vlaneseq
  %v42 = vshrl.u32 %v41, 7
  %v43 = vsub.s32 0, %v42
  %v44 = vrot.slane %v39, %v43
  %vm46 = vcmask 39936
  %v48 = vsel %vm46, %v30, 0
  %v51 = vsel %vm46, %v31, 0
  %v54 = vsel %vm46, %v32, 0
  %v57 = vsel %vm46, %v33, 0
  %v60 = vsel %vm46, %v34, 0
  %v63 = vsel %vm46, %v35, 0
  %v66 = vsel %vm46, %v36, 0
  %v69 = vsel %vm46, %v37, 0
  %vm71 = vcmask 1044480
  %v73 = vsel %vm71, %v38, 0
  %75 = vmatprep.subr.mxu0 0.0
  %76 = vmatpush1.msra.mxu0 %v73
  %77 = vmatprep.subr.mxu0 0.0
  %78 = vmatpush1.msra.mxu0 0.0
  %79 = vmatprep.subr.mxu0 0.0
  %80 = vmatpush1.msra.mxu0 0.0
  %81 = vmatprep.subr.mxu0 0.0
  %82 = vmatpush1.msra.mxu0 0.0
  %83 = vmatprep.subr.mxu0 0.0
  %84 = vmatpush1.msra.mxu0 0.0
  %85 = vmatprep.subr.mxu0 0.0
  %86 = vmatpush1.msra.mxu0 0.0
  %87 = vmatprep.subr.mxu0 0.0
  %88 = vmatpush1.msra.mxu0 0.0
  %89 = vmatprep.subr.mxu0 0.0
  %90 = vmatpush1.msra.mxu0 0.0
  %91 = vmatprep.subr.mxu0 0.0
  %92 = vmatpush1.msra.mxu0 0.0
  %93 = vmatprep.subr.mxu0 0.0
  %94 = vmatpush1.msra.mxu0 0.0
  %95 = vmatprep.subr.mxu0 0.0
  %96 = vmatpush1.msra.mxu0 0.0
  %97 = vmatprep.subr.mxu0 0.0
  %98 = vmatpush1.msra.mxu0 0.0
  %99 = vmatprep.subr.mxu0 0.0
  %100 = vmatpush1.msra.mxu0 0.0
  %101 = vmatprep.subr.mxu0 0.0
  %102 = vmatpush1.msra.mxu0 0.0
  %103 = vmatprep.subr.mxu0 0.0
  %104 = vmatpush1.msra.mxu0 0.0
  %105 = vmatprep.subr.mxu0 0.0
  %106 = vmatpush1.msra.mxu0 0.0
  %107 = vmatprep.subr.mxu0 0.0
  %108 = vmatpush1.msra.mxu0 0.0
  %109 = vmatprep.subr.mxu0 0.0
  %110 = vmatpush1.msra.mxu0 0.0
  %111 = vmatprep.subr.mxu0 0.0
  %112 = vmatpush1.msra.mxu0 0.0
  %113 = vmatprep.subr.mxu0 0.0
  %114 = vmatpush1.msra.mxu0 0.0
  %115 = vmatprep.subr.mxu0 0.0
  %116 = vmatpush1.msra.mxu0 0.0
  %117 = vmatprep.subr.mxu0 0.0
  %118 = vmatpush1.msra.mxu0 0.0
  %119 = vmatprep.subr.mxu0 0.0
  %120 = vmatpush1.msra.mxu0 0.0
  %121 = vmatprep.subr.mxu0 0.0
  %122 = vmatpush1.msra.mxu0 0.0
  %123 = vmatprep.subr.mxu0 0.0
  %124 = vmatpush1.msra.mxu0 0.0
  %125 = vmatprep.subr.mxu0 0.0
  %126 = vmatpush1.msra.mxu0 0.0
  %127 = vmatprep.subr.mxu0 0.0
  %128 = vmatpush1.msra.mxu0 0.0
  %129 = vmatprep.subr.mxu0 0.0
  %130 = vmatpush1.msra.mxu0 0.0
  %131 = vmatprep.subr.mxu0 0.0
  %132 = vmatpush1.msra.mxu0 0.0
  %133 = vmatprep.subr.mxu0 0.0
  %134 = vmatpush1.msra.mxu0 0.0
  %135 = vmatprep.subr.mxu0 0.0
  %136 = vmatpush1.msra.mxu0 0.0
  %137 = vmatprep.subr.mxu0 0.0
  %138 = vmatpush1.msra.mxu0 0.0
  %139 = vmatprep.mubr.f32.mxu0 0.0
  %140 = vmatmul.mubr.f32.gmra.mrb[0].mxu0 %v48
  %v141 = vpop.f32.mrb[0].mxu0
  %v142 = vadd.f32 %v44, %v141
  %v143 = vpop.f32.mrb[0].mxu0
  %144 = vmatprep.mubr.f32.mxu0 0.0
  %145 = vmatmul.mubr.f32.gmra.mrb[0].mxu0 %v51
  %v146 = vpop.f32.mrb[0].mxu0
  %v147 = vadd.f32 %v44, %v146
  %v148 = vpop.f32.mrb[0].mxu0
  %149 = vmatprep.mubr.f32.mxu0 0.0
  %150 = vmatmul.mubr.f32.gmra.mrb[0].mxu0 %v54
  %v151 = vpop.f32.mrb[0].mxu0
  %v152 = vadd.f32 %v44, %v151
  %v153 = vpop.f32.mrb[0].mxu0
  %154 = vmatprep.mubr.f32.mxu0 0.0
  %155 = vmatmul.mubr.f32.gmra.mrb[0].mxu0 %v57
  %v156 = vpop.f32.mrb[0].mxu0
  %v157 = vadd.f32 %v44, %v156
  %v158 = vpop.f32.mrb[0].mxu0
  %159 = vmatprep.mubr.f32.mxu0 0.0
  %160 = vmatmul.mubr.f32.gmra.mrb[0].mxu0 %v60
  %v161 = vpop.f32.mrb[0].mxu0
  %v162 = vadd.f32 %v44, %v161
  %v163 = vpop.f32.mrb[0].mxu0
  %164 = vmatprep.mubr.f32.mxu0 0.0
  %165 = vmatmul.mubr.f32.gmra.mrb[0].mxu0 %v63
  %v166 = vpop.f32.mrb[0].mxu0
  %v167 = vadd.f32 %v44, %v166
  %v168 = vpop.f32.mrb[0].mxu0
  %169 = vmatprep.mubr.f32.mxu0 0.0
  %170 = vmatmul.mubr.f32.gmra.mrb[0].mxu0 %v66
  %v171 = vpop.f32.mrb[0].mxu0
  %v172 = vadd.f32 %v44, %v171
  %v173 = vpop.f32.mrb[0].mxu0
  %174 = vmatprep.mubr.f32.mxu0 0.0
  %175 = vmatmul.mubr.f32.gmra.mrb[0].mxu0 %v69
  %v176 = vpop.f32.mrb[0].mxu0
  %v177 = vadd.f32 %v44, %v176
  %v178 = vpop.f32.mrb[0].mxu0
  %179 = vdwg.mxu0
  %180 = vst [vmem:[#allocation2] sm:$0xff] %v142
  %181 = vst [vmem:[#allocation2 + $0x8] sm:$0xff] %v147
  %182 = vst [vmem:[#allocation2 + $0x10] sm:$0xff] %v152
  %183 = vst [vmem:[#allocation2 + $0x18] sm:$0xff] %v157
  %184 = vst [vmem:[#allocation2 + $0x20] sm:$0xff] %v162
  %185 = vst [vmem:[#allocation2 + $0x28] sm:$0xff] %v167
  %186 = vst [vmem:[#allocation2 + $0x30] sm:$0xff] %v172
  %187 = vst [vmem:[#allocation2 + $0x38] sm:$0xff] %v177
  %v188 = vld [vmem:[%s3] sm:$0xff]
  %v189 = vld [vmem:[%s3 + $0x8] sm:$0xff]
  %v190 = vld [vmem:[%s3 + $0x10] sm:$0xff]
  %v191 = vld [vmem:[%s3 + $0x18] sm:$0xff]
  %v192 = vld [vmem:[#allocation3] sm:$0xff]
  %v193 = vld [vmem:[#allocation4] sm:$0xff]
  %v194 = vld [vmem:[#allocation2] sm:$0xff]
  %vm195 = vcmask 261120
  %v197 = vsel %vm195, %v192, 0
  %199 = vmatprep.subr.mxu0 0.0
  %200 = vmatpush1.msra.mxu0 %v188
  %201 = vmatprep.subr.mxu0 0.0
  %202 = vmatpush1.msra.mxu0 %v189
  %203 = vmatprep.subr.mxu0 0.0
  %204 = vmatpush1.msra.mxu0 %v190
  %205 = vmatprep.subr.mxu0 0.0
  %206 = vmatpush1.msra.mxu0 %v191
  %207 = vmatprep.subr.mxu0 0.0
  %208 = vmatpush1.msra.mxu0 0.0
  %209 = vmatprep.subr.mxu0 0.0
  %210 = vmatpush1.msra.mxu0 0.0
  %211 = vmatprep.subr.mxu0 0.0
  %212 = vmatpush1.msra.mxu0 0.0
  %213 = vmatprep.subr.mxu0 0.0
  %214 = vmatpush1.msra.mxu0 0.0
  %215 = vmatprep.subr.mxu0 0.0
  %216 = vmatpush1.msra.mxu0 0.0
  %217 = vmatprep.subr.mxu0 0.0
  %218 = vmatpush1.msra.mxu0 0.0
  %219 = vmatprep.subr.mxu0 0.0
  %220 = vmatpush1.msra.mxu0 0.0
  %221 = vmatprep.subr.mxu0 0.0
  %222 = vmatpush1.msra.mxu0 0.0
  %223 = vmatprep.subr.mxu0 0.0
  %224 = vmatpush1.msra.mxu0 0.0
  %225 = vmatprep.subr.mxu0 0.0
  %226 = vmatpush1.msra.mxu0 0.0
  %227 = vmatprep.subr.mxu0 0.0
  %228 = vmatpush1.msra.mxu0 0.0
  %229 = vmatprep.subr.mxu0 0.0
  %230 = vmatpush1.msra.mxu0 0.0
  %231 = vmatprep.subr.mxu0 0.0
  %232 = vmatpush1.msra.mxu0 0.0
  %233 = vmatprep.subr.mxu0 0.0
  %234 = vmatpush1.msra.mxu0 0.0
  %235 = vmatprep.subr.mxu0 0.0
  %236 = vmatpush1.msra.mxu0 0.0
  %237 = vmatprep.subr.mxu0 0.0
  %238 = vmatpush1.msra.mxu0 0.0
  %239 = vmatprep.subr.mxu0 0.0
  %240 = vmatpush1.msra.mxu0 0.0
  %241 = vmatprep.subr.mxu0 0.0
  %242 = vmatpush1.msra.mxu0 0.0
  %243 = vmatprep.subr.mxu0 0.0
  %244 = vmatpush1.msra.mxu0 0.0
  %245 = vmatprep.subr.mxu0 0.0
  %246 = vmatpush1.msra.mxu0 0.0
  %247 = vmatprep.subr.mxu0 0.0
  %248 = vmatpush1.msra.mxu0 0.0
  %249 = vmatprep.subr.mxu0 0.0
  %250 = vmatpush1.msra.mxu0 0.0
  %251 = vmatprep.subr.mxu0 0.0
  %252 = vmatpush1.msra.mxu0 0.0
  %253 = vmatprep.subr.mxu0 0.0
  %254 = vmatpush1.msra.mxu0 0.0
  %255 = vmatprep.subr.mxu0 0.0
  %256 = vmatpush1.msra.mxu0 0.0
  %257 = vmatprep.subr.mxu0 0.0
  %258 = vmatpush1.msra.mxu0 0.0
  %259 = vmatprep.subr.mxu0 0.0
  %260 = vmatpush1.msra.mxu0 0.0
  %261 = vmatprep.subr.mxu0 0.0
  %262 = vmatpush1.msra.mxu0 0.0
  %263 = vmatprep.mubr.f32.mxu0 0.0
  %264 = vmatmul.mubr.f32.gmra.mrb[0].mxu0 %v197
  %v265 = vpop.f32.mrb[0].mxu0
  %v266 = vadd.f32 0.0, %v265
  %v267 = vpop.f32.mrb[0].mxu0
  %268 = vdwg.mxu0
  %v269 = vadd.f32 %v194, %v266
  %v270 = vxor.u32 %v269, 2147483648
  %v271 = vmul.f32 %v270, 1.442695
  %v272 = vpow.pop %v271
  %v273 = vadd.f32 %v272, 1.0
  %v274 = vrcp.pop %v273
  %v275 = vmul.f32 1.0, %v274
  %v276 = vtanh.pop %v269
  %278 = vrot.lane.b32.xlu0 %v193, 32
  %v279 = vpop.permute.xlu0 %278
  %v281 = vmul.f32 %v275, %v279
  %283 = vrot.lane.b32.xlu0 %v276, 32
  %v284 = vpop.permute.xlu0 %283
  %v286 = vmul.f32 %v275, %v284
  %288 = vrot.lane.b32.xlu0 %v286, 32
  %v289 = vpop.permute.xlu0 %288
  %v291 = vadd.f32 %v281, %v289
  %v292 = vtanh.pop %v291
  %294 = vrot.lane.b32.xlu0 %v292, 32
  %v295 = vpop.permute.xlu0 %294
  %v297 = vmul.f32 %v275, %v295
  %s298 = scalar_lea.vmem [#allocation2], 8
  %v299 = vld [vmem:[%s298] sm:$0xff]
  %301 = vrot.lane.b32.xlu0 %v297, 64
  %v302 = vpop.permute.xlu0 %301
  %v303 = vsel %vm195, %v302, 0
  %305 = vmatprep.subr.mxu0 0.0
  %306 = vmatpush1.msra.mxu0 %v188
  %307 = vmatprep.subr.mxu0 0.0
  %308 = vmatpush1.msra.mxu0 %v189
  %309 = vmatprep.subr.mxu0 0.0
  %310 = vmatpush1.msra.mxu0 %v190
  %311 = vmatprep.subr.mxu0 0.0
  %312 = vmatpush1.msra.mxu0 %v191
  %313 = vmatprep.subr.mxu0 0.0
  %314 = vmatpush1.msra.mxu0 0.0
  %315 = vmatprep.subr.mxu0 0.0
  %316 = vmatpush1.msra.mxu0 0.0
  %317 = vmatprep.subr.mxu0 0.0
  %318 = vmatpush1.msra.mxu0 0.0
  %319 = vmatprep.subr.mxu0 0.0
  %320 = vmatpush1.msra.mxu0 0.0
  %321 = vmatprep.subr.mxu0 0.0
  %322 = vmatpush1.msra.mxu0 0.0
  %323 = vmatprep.subr.mxu0 0.0
  %324 = vmatpush1.msra.mxu0 0.0
  %325 = vmatprep.subr.mxu0 0.0
  %326 = vmatpush1.msra.mxu0 0.0
  %327 = vmatprep.subr.mxu0 0.0
  %328 = vmatpush1.msra.mxu0 0.0
  %329 = vmatprep.subr.mxu0 0.0
  %330 = vmatpush1.msra.mxu0 0.0
  %331 = vmatprep.subr.mxu0 0.0
  %332 = vmatpush1.msra.mxu0 0.0
  %333 = vmatprep.subr.mxu0 0.0
  %334 = vmatpush1.msra.mxu0 0.0
  %335 = vmatprep.subr.mxu0 0.0
  %336 = vmatpush1.msra.mxu0 0.0
  %337 = vmatprep.subr.mxu0 0.0
  %338 = vmatpush1.msra.mxu0 0.0
  %339 = vmatprep.subr.mxu0 0.0
  %340 = vmatpush1.msra.mxu0 0.0
  %341 = vmatprep.subr.mxu0 0.0
  %342 = vmatpush1.msra.mxu0 0.0
  %343 = vmatprep.subr.mxu0 0.0
  %344 = vmatpush1.msra.mxu0 0.0
  %345 = vmatprep.subr.mxu0 0.0
  %346 = vmatpush1.msra.mxu0 0.0
  %347 = vmatprep.subr.mxu0 0.0
  %348 = vmatpush1.msra.mxu0 0.0
  %349 = vmatprep.subr.mxu0 0.0
  %350 = vmatpush1.msra.mxu0 0.0
  %351 = vmatprep.subr.mxu0 0.0
  %352 = vmatpush1.msra.mxu0 0.0
  %353 = vmatprep.subr.mxu0 0.0
  %354 = vmatpush1.msra.mxu0 0.0
  %355 = vmatprep.subr.mxu0 0.0
  %356 = vmatpush1.msra.mxu0 0.0
  %357 = vmatprep.subr.mxu0 0.0
  %358 = vmatpush1.msra.mxu0 0.0
  %359 = vmatprep.subr.mxu0 0.0
  %360 = vmatpush1.msra.mxu0 0.0
  %361 = vmatprep.subr.mxu0 0.0
  %362 = vmatpush1.msra.mxu0 0.0
  %363 = vmatprep.subr.mxu0 0.0
  %364 = vmatpush1.msra.mxu0 0.0
  %365 = vmatprep.subr.mxu0 0.0
  %366 = vmatpush1.msra.mxu0 0.0
  %367 = vmatprep.subr.mxu0 0.0
  %368 = vmatpush1.msra.mxu0 0.0
  %369 = vmatprep.mubr.f32.mxu0 0.0
  %370 = vmatmul.mubr.f32.gmra.mrb[0].mxu0 %v303
  %v371 = vpop.f32.mrb[0].mxu0
  %v372 = vadd.f32 0.0, %v371
  %v373 = vpop.f32.mrb[0].mxu0
  %374 = vdwg.mxu0
  %v375 = vadd.f32 %v299, %v372
  %v376 = vxor.u32 %v375, 2147483648
  %v377 = vmul.f32 %v376, 1.442695
  %v378 = vpow.pop %v377
  %v379 = vadd.f32 %v378, 1.0
  %v380 = vrcp.pop %v379
  %v381 = vmul.f32 1.0, %v380
  %v382 = vtanh.pop %v375
  %v383 = vmul.f32 %v381, %v291
  %385 = vrot.lane.b32.xlu0 %v382, 32
  %v386 = vpop.permute.xlu0 %385
  %v388 = vmul.f32 %v381, %v386
  %390 = vrot.lane.b32.xlu0 %v388, 32
  %v391 = vpop.permute.xlu0 %390
  %v393 = vadd.f32 %v383, %v391
  %v394 = vtanh.pop %v393
  %396 = vrot.lane.b32.xlu0 %v394, 32
  %v397 = vpop.permute.xlu0 %396
  %v399 = vmul.f32 %v381, %v397
  %s400 = scalar_lea.vmem [#allocation2], 16
  %v401 = vld [vmem:[%s400] sm:$0xff]
  %403 = vrot.lane.b32.xlu0 %v399, 64
  %v404 = vpop.permute.xlu0 %403
  %v405 = vsel %vm195, %v404, 0
  %407 = vmatprep.subr.mxu0 0.0
  %408 = vmatpush1.msra.mxu0 %v188
  %409 = vmatprep.subr.mxu0 0.0
  %410 = vmatpush1.msra.mxu0 %v189
  %411 = vmatprep.subr.mxu0 0.0
  %412 = vmatpush1.msra.mxu0 %v190
  %413 = vmatprep.subr.mxu0 0.0
  %414 = vmatpush1.msra.mxu0 %v191
  %415 = vmatprep.subr.mxu0 0.0
  %416 = vmatpush1.msra.mxu0 0.0
  %417 = vmatprep.subr.mxu0 0.0
  %418 = vmatpush1.msra.mxu0 0.0
  %419 = vmatprep.subr.mxu0 0.0
  %420 = vmatpush1.msra.mxu0 0.0
  %421 = vmatprep.subr.mxu0 0.0
  %422 = vmatpush1.msra.mxu0 0.0
  %423 = vmatprep.subr.mxu0 0.0
  %424 = vmatpush1.msra.mxu0 0.0
  %425 = vmatprep.subr.mxu0 0.0
  %426 = vmatpush1.msra.mxu0 0.0
  %427 = vmatprep.subr.mxu0 0.0
  %428 = vmatpush1.msra.mxu0 0.0
  %429 = vmatprep.subr.mxu0 0.0
  %430 = vmatpush1.msra.mxu0 0.0
  %431 = vmatprep.subr.mxu0 0.0
  %432 = vmatpush1.msra.mxu0 0.0
  %433 = vmatprep.subr.mxu0 0.0
  %434 = vmatpush1.msra.mxu0 0.0
  %435 = vmatprep.subr.mxu0 0.0
  %436 = vmatpush1.msra.mxu0 0.0
  %437 = vmatprep.subr.mxu0 0.0
  %438 = vmatpush1.msra.mxu0 0.0
  %439 = vmatprep.subr.mxu0 0.0
  %440 = vmatpush1.msra.mxu0 0.0
  %441 = vmatprep.subr.mxu0 0.0
  %442 = vmatpush1.msra.mxu0 0.0
  %443 = vmatprep.subr.mxu0 0.0
  %444 = vmatpush1.msra.mxu0 0.0
  %445 = vmatprep.subr.mxu0 0.0
  %446 = vmatpush1.msra.mxu0 0.0
  %447 = vmatprep.subr.mxu0 0.0
  %448 = vmatpush1.msra.mxu0 0.0
  %449 = vmatprep.subr.mxu0 0.0
  %450 = vmatpush1.msra.mxu0 0.0
  %451 = vmatprep.subr.mxu0 0.0
  %452 = vmatpush1.msra.mxu0 0.0
  %453 = vmatprep.subr.mxu0 0.0
  %454 = vmatpush1.msra.mxu0 0.0
  %455 = vmatprep.subr.mxu0 0.0
  %456 = vmatpush1.msra.mxu0 0.0
  %457 = vmatprep.subr.mxu0 0.0
  %458 = vmatpush1.msra.mxu0 0.0
  %459 = vmatprep.subr.mxu0 0.0
  %460 = vmatpush1.msra.mxu0 0.0
  %461 = vmatprep.subr.mxu0 0.0
  %462 = vmatpush1.msra.mxu0 0.0
  %463 = vmatprep.subr.mxu0 0.0
  %464 = vmatpush1.msra.mxu0 0.0
  %465 = vmatprep.subr.mxu0 0.0
  %466 = vmatpush1.msra.mxu0 0.0
  %467 = vmatprep.subr.mxu0 0.0
  %468 = vmatpush1.msra.mxu0 0.0
  %469 = vmatprep.subr.mxu0 0.0
  %470 = vmatpush1.msra.mxu0 0.0
  %471 = vmatprep.mubr.f32.mxu0 0.0
  %472 = vmatmul.mubr.f32.gmra.mrb[0].mxu0 %v405
  %v473 = vpop.f32.mrb[0].mxu0
  %v474 = vadd.f32 0.0, %v473
  %v475 = vpop.f32.mrb[0].mxu0
  %476 = vdwg.mxu0
  %v477 = vadd.f32 %v401, %v474
  %v478 = vxor.u32 %v477, 2147483648
  %v479 = vmul.f32 %v478, 1.442695
  %v480 = vpow.pop %v479
  %v481 = vadd.f32 %v480, 1.0
  %v482 = vrcp.pop %v481
  %v483 = vmul.f32 1.0, %v482
  %v484 = vtanh.pop %v477
  %v485 = vmul.f32 %v483, %v393
  %487 = vrot.lane.b32.xlu0 %v484, 32
  %v488 = vpop.permute.xlu0 %487
  %v490 = vmul.f32 %v483, %v488
  %492 = vrot.lane.b32.xlu0 %v490, 32
  %v493 = vpop.permute.xlu0 %492
  %v495 = vadd.f32 %v485, %v493
  %v496 = vtanh.pop %v495
  %498 = vrot.lane.b32.xlu0 %v496, 32
  %v499 = vpop.permute.xlu0 %498
  %v501 = vmul.f32 %v483, %v499
  %s502 = scalar_lea.vmem [#allocation2], 24
  %v503 = vld [vmem:[%s502] sm:$0xff]
  %505 = vrot.lane.b32.xlu0 %v501, 64
  %v506 = vpop.permute.xlu0 %505
  %v507 = vsel %vm195, %v506, 0
  %509 = vmatprep.subr.mxu0 0.0
  %510 = vmatpush1.msra.mxu0 %v188
  %511 = vmatprep.subr.mxu0 0.0
  %512 = vmatpush1.msra.mxu0 %v189
  %513 = vmatprep.subr.mxu0 0.0
  %514 = vmatpush1.msra.mxu0 %v190
  %515 = vmatprep.subr.mxu0 0.0
  %516 = vmatpush1.msra.mxu0 %v191
  %517 = vmatprep.subr.mxu0 0.0
  %518 = vmatpush1.msra.mxu0 0.0
  %519 = vmatprep.subr.mxu0 0.0
  %520 = vmatpush1.msra.mxu0 0.0
  %521 = vmatprep.subr.mxu0 0.0
  %522 = vmatpush1.msra.mxu0 0.0
  %523 = vmatprep.subr.mxu0 0.0
  %524 = vmatpush1.msra.mxu0 0.0
  %525 = vmatprep.subr.mxu0 0.0
  %526 = vmatpush1.msra.mxu0 0.0
  %527 = vmatprep.subr.mxu0 0.0
  %528 = vmatpush1.msra.mxu0 0.0
  %529 = vmatprep.subr.mxu0 0.0
  %530 = vmatpush1.msra.mxu0 0.0
  %531 = vmatprep.subr.mxu0 0.0
  %532 = vmatpush1.msra.mxu0 0.0
  %533 = vmatprep.subr.mxu0 0.0
  %534 = vmatpush1.msra.mxu0 0.0
  %535 = vmatprep.subr.mxu0 0.0
  %536 = vmatpush1.msra.mxu0 0.0
  %537 = vmatprep.subr.mxu0 0.0
  %538 = vmatpush1.msra.mxu0 0.0
  %539 = vmatprep.subr.mxu0 0.0
  %540 = vmatpush1.msra.mxu0 0.0
  %541 = vmatprep.subr.mxu0 0.0
  %542 = vmatpush1.msra.mxu0 0.0
  %543 = vmatprep.subr.mxu0 0.0
  %544 = vmatpush1.msra.mxu0 0.0
  %545 = vmatprep.subr.mxu0 0.0
  %546 = vmatpush1.msra.mxu0 0.0
  %547 = vmatprep.subr.mxu0 0.0
  %548 = vmatpush1.msra.mxu0 0.0
  %549 = vmatprep.subr.mxu0 0.0
  %550 = vmatpush1.msra.mxu0 0.0
  %551 = vmatprep.subr.mxu0 0.0
  %552 = vmatpush1.msra.mxu0 0.0
  %553 = vmatprep.subr.mxu0 0.0
  %554 = vmatpush1.msra.mxu0 0.0
  %555 = vmatprep.subr.mxu0 0.0
  %556 = vmatpush1.msra.mxu0 0.0
  %557 = vmatprep.subr.mxu0 0.0
  %558 = vmatpush1.msra.mxu0 0.0
  %559 = vmatprep.subr.mxu0 0.0
  %560 = vmatpush1.msra.mxu0 0.0
  %561 = vmatprep.subr.mxu0 0.0
  %562 = vmatpush1.msra.mxu0 0.0
  %563 = vmatprep.subr.mxu0 0.0
  %564 = vmatpush1.msra.mxu0 0.0
  %565 = vmatprep.subr.mxu0 0.0
  %566 = vmatpush1.msra.mxu0 0.0
  %567 = vmatprep.subr.mxu0 0.0
  %568 = vmatpush1.msra.mxu0 0.0
  %569 = vmatprep.subr.mxu0 0.0
  %570 = vmatpush1.msra.mxu0 0.0
  %571 = vmatprep.subr.mxu0 0.0
  %572 = vmatpush1.msra.mxu0 0.0
  %573 = vmatprep.mubr.f32.mxu0 0.0
  %574 = vmatmul.mubr.f32.gmra.mrb[0].mxu0 %v507
  %v575 = vpop.f32.mrb[0].mxu0
  %v576 = vadd.f32 0.0, %v575
  %v577 = vpop.f32.mrb[0].mxu0
  %578 = vdwg.mxu0
  %v579 = vadd.f32 %v503, %v576
  %v580 = vxor.u32 %v579, 2147483648
  %v581 = vmul.f32 %v580, 1.442695
  %v582 = vpow.pop %v581
  %v583 = vadd.f32 %v582, 1.0
  %v584 = vrcp.pop %v583
  %v585 = vmul.f32 1.0, %v584
  %v586 = vtanh.pop %v579
  %v587 = vmul.f32 %v585, %v495
  %589 = vrot.lane.b32.xlu0 %v586, 32
  %v590 = vpop.permute.xlu0 %589
  %v592 = vmul.f32 %v585, %v590
  %594 = vrot.lane.b32.xlu0 %v592, 32
  %v595 = vpop.permute.xlu0 %594
  %v597 = vadd.f32 %v587, %v595
  %v598 = vtanh.pop %v597
  %600 = vrot.lane.b32.xlu0 %v598, 32
  %v601 = vpop.permute.xlu0 %600
  %v603 = vmul.f32 %v585, %v601
  %s604 = scalar_lea.vmem [#allocation2], 32
  %v605 = vld [vmem:[%s604] sm:$0xff]
  %607 = vrot.lane.b32.xlu0 %v603, 64
  %v608 = vpop.permute.xlu0 %607
  %v609 = vsel %vm195, %v608, 0
  %611 = vmatprep.subr.mxu0 0.0
  %612 = vmatpush1.msra.mxu0 %v188
  %613 = vmatprep.subr.mxu0 0.0
  %614 = vmatpush1.msra.mxu0 %v189
  %615 = vmatprep.subr.mxu0 0.0
  %616 = vmatpush1.msra.mxu0 %v190
  %617 = vmatprep.subr.mxu0 0.0
  %618 = vmatpush1.msra.mxu0 %v191
  %619 = vmatprep.subr.mxu0 0.0
  %620 = vmatpush1.msra.mxu0 0.0
  %621 = vmatprep.subr.mxu0 0.0
  %622 = vmatpush1.msra.mxu0 0.0
  %623 = vmatprep.subr.mxu0 0.0
  %624 = vmatpush1.msra.mxu0 0.0
  %625 = vmatprep.subr.mxu0 0.0
  %626 = vmatpush1.msra.mxu0 0.0
  %627 = vmatprep.subr.mxu0 0.0
  %628 = vmatpush1.msra.mxu0 0.0
  %629 = vmatprep.subr.mxu0 0.0
  %630 = vmatpush1.msra.mxu0 0.0
  %631 = vmatprep.subr.mxu0 0.0
  %632 = vmatpush1.msra.mxu0 0.0
  %633 = vmatprep.subr.mxu0 0.0
  %634 = vmatpush1.msra.mxu0 0.0
  %635 = vmatprep.subr.mxu0 0.0
  %636 = vmatpush1.msra.mxu0 0.0
  %637 = vmatprep.subr.mxu0 0.0
  %638 = vmatpush1.msra.mxu0 0.0
  %639 = vmatprep.subr.mxu0 0.0
  %640 = vmatpush1.msra.mxu0 0.0
  %641 = vmatprep.subr.mxu0 0.0
  %642 = vmatpush1.msra.mxu0 0.0
  %643 = vmatprep.subr.mxu0 0.0
  %644 = vmatpush1.msra.mxu0 0.0
  %645 = vmatprep.subr.mxu0 0.0
  %646 = vmatpush1.msra.mxu0 0.0
  %647 = vmatprep.subr.mxu0 0.0
  %648 = vmatpush1.msra.mxu0 0.0
  %649 = vmatprep.subr.mxu0 0.0
  %650 = vmatpush1.msra.mxu0 0.0
  %651 = vmatprep.subr.mxu0 0.0
  %652 = vmatpush1.msra.mxu0 0.0
  %653 = vmatprep.subr.mxu0 0.0
  %654 = vmatpush1.msra.mxu0 0.0
  %655 = vmatprep.subr.mxu0 0.0
  %656 = vmatpush1.msra.mxu0 0.0
  %657 = vmatprep.subr.mxu0 0.0
  %658 = vmatpush1.msra.mxu0 0.0
  %659 = vmatprep.subr.mxu0 0.0
  %660 = vmatpush1.msra.mxu0 0.0
  %661 = vmatprep.subr.mxu0 0.0
  %662 = vmatpush1.msra.mxu0 0.0
  %663 = vmatprep.subr.mxu0 0.0
  %664 = vmatpush1.msra.mxu0 0.0
  %665 = vmatprep.subr.mxu0 0.0
  %666 = vmatpush1.msra.mxu0 0.0
  %667 = vmatprep.subr.mxu0 0.0
  %668 = vmatpush1.msra.mxu0 0.0
  %669 = vmatprep.subr.mxu0 0.0
  %670 = vmatpush1.msra.mxu0 0.0
  %671 = vmatprep.subr.mxu0 0.0
  %672 = vmatpush1.msra.mxu0 0.0
  %673 = vmatprep.subr.mxu0 0.0
  %674 = vmatpush1.msra.mxu0 0.0
  %675 = vmatprep.mubr.f32.mxu0 0.0
  %676 = vmatmul.mubr.f32.gmra.mrb[0].mxu0 %v609
  %v677 = vpop.f32.mrb[0].mxu0
  %v678 = vadd.f32 0.0, %v677
  %v679 = vpop.f32.mrb[0].mxu0
  %680 = vdwg.mxu0
  %v681 = vadd.f32 %v605, %v678
  %v682 = vxor.u32 %v681, 2147483648
  %v683 = vmul.f32 %v682, 1.442695
  %v684 = vpow.pop %v683
  %v685 = vadd.f32 %v684, 1.0
  %v686 = vrcp.pop %v685
  %v687 = vmul.f32 1.0, %v686
  %v688 = vtanh.pop %v681
  %v689 = vmul.f32 %v687, %v597
  %691 = vrot.lane.b32.xlu0 %v688, 32
  %v692 = vpop.permute.xlu0 %691
  %v694 = vmul.f32 %v687, %v692
  %696 = vrot.lane.b32.xlu0 %v694, 32
  %v697 = vpop.permute.xlu0 %696
  %v699 = vadd.f32 %v689, %v697
  %v700 = vtanh.pop %v699
  %702 = vrot.lane.b32.xlu0 %v700, 32
  %v703 = vpop.permute.xlu0 %702
  %v705 = vmul.f32 %v687, %v703
  %s706 = scalar_lea.vmem [#allocation2], 40
  %v707 = vld [vmem:[%s706] sm:$0xff]
  %709 = vrot.lane.b32.xlu0 %v705, 64
  %v710 = vpop.permute.xlu0 %709
  %v711 = vsel %vm195, %v710, 0
  %713 = vmatprep.subr.mxu0 0.0
  %714 = vmatpush1.msra.mxu0 %v188
  %715 = vmatprep.subr.mxu0 0.0
  %716 = vmatpush1.msra.mxu0 %v189
  %717 = vmatprep.subr.mxu0 0.0
  %718 = vmatpush1.msra.mxu0 %v190
  %719 = vmatprep.subr.mxu0 0.0
  %720 = vmatpush1.msra.mxu0 %v191
  %721 = vmatprep.subr.mxu0 0.0
  %722 = vmatpush1.msra.mxu0 0.0
  %723 = vmatprep.subr.mxu0 0.0
  %724 = vmatpush1.msra.mxu0 0.0
  %725 = vmatprep.subr.mxu0 0.0
  %726 = vmatpush1.msra.mxu0 0.0
  %727 = vmatprep.subr.mxu0 0.0
  %728 = vmatpush1.msra.mxu0 0.0
  %729 = vmatprep.subr.mxu0 0.0
  %730 = vmatpush1.msra.mxu0 0.0
  %731 = vmatprep.subr.mxu0 0.0
  %732 = vmatpush1.msra.mxu0 0.0
  %733 = vmatprep.subr.mxu0 0.0
  %734 = vmatpush1.msra.mxu0 0.0
  %735 = vmatprep.subr.mxu0 0.0
  %736 = vmatpush1.msra.mxu0 0.0
  %737 = vmatprep.subr.mxu0 0.0
  %738 = vmatpush1.msra.mxu0 0.0
  %739 = vmatprep.subr.mxu0 0.0
  %740 = vmatpush1.msra.mxu0 0.0
  %741 = vmatprep.subr.mxu0 0.0
  %742 = vmatpush1.msra.mxu0 0.0
  %743 = vmatprep.subr.mxu0 0.0
  %744 = vmatpush1.msra.mxu0 0.0
  %745 = vmatprep.subr.mxu0 0.0
  %746 = vmatpush1.msra.mxu0 0.0
  %747 = vmatprep.subr.mxu0 0.0
  %748 = vmatpush1.msra.mxu0 0.0
  %749 = vmatprep.subr.mxu0 0.0
  %750 = vmatpush1.msra.mxu0 0.0
  %751 = vmatprep.subr.mxu0 0.0
  %752 = vmatpush1.msra.mxu0 0.0
  %753 = vmatprep.subr.mxu0 0.0
  %754 = vmatpush1.msra.mxu0 0.0
  %755 = vmatprep.subr.mxu0 0.0
  %756 = vmatpush1.msra.mxu0 0.0
  %757 = vmatprep.subr.mxu0 0.0
  %758 = vmatpush1.msra.mxu0 0.0
  %759 = vmatprep.subr.mxu0 0.0
  %760 = vmatpush1.msra.mxu0 0.0
  %761 = vmatprep.subr.mxu0 0.0
  %762 = vmatpush1.msra.mxu0 0.0
  %763 = vmatprep.subr.mxu0 0.0
  %764 = vmatpush1.msra.mxu0 0.0
  %765 = vmatprep.subr.mxu0 0.0
  %766 = vmatpush1.msra.mxu0 0.0
  %767 = vmatprep.subr.mxu0 0.0
  %768 = vmatpush1.msra.mxu0 0.0
  %769 = vmatprep.subr.mxu0 0.0
  %770 = vmatpush1.msra.mxu0 0.0
  %771 = vmatprep.subr.mxu0 0.0
  %772 = vmatpush1.msra.mxu0 0.0
  %773 = vmatprep.subr.mxu0 0.0
  %774 = vmatpush1.msra.mxu0 0.0
  %775 = vmatprep.subr.mxu0 0.0
  %776 = vmatpush1.msra.mxu0 0.0
  %777 = vmatprep.mubr.f32.mxu0 0.0
  %778 = vmatmul.mubr.f32.gmra.mrb[0].mxu0 %v711
  %v779 = vpop.f32.mrb[0].mxu0
  %v780 = vadd.f32 0.0, %v779
  %v781 = vpop.f32.mrb[0].mxu0
  %782 = vdwg.mxu0
  %v783 = vadd.f32 %v707, %v780
  %v784 = vxor.u32 %v783, 2147483648
  %v785 = vmul.f32 %v784, 1.442695
  %v786 = vpow.pop %v785
  %v787 = vadd.f32 %v786, 1.0
  %v788 = vrcp.pop %v787
  %v789 = vmul.f32 1.0, %v788
  %v790 = vtanh.pop %v783
  %v791 = vmul.f32 %v789, %v699
  %793 = vrot.lane.b32.xlu0 %v790, 32
  %v794 = vpop.permute.xlu0 %793
  %v796 = vmul.f32 %v789, %v794
  %798 = vrot.lane.b32.xlu0 %v796, 32
  %v799 = vpop.permute.xlu0 %798
  %v801 = vadd.f32 %v791, %v799
  %v802 = vtanh.pop %v801
  %804 = vrot.lane.b32.xlu0 %v802, 32
  %v805 = vpop.permute.xlu0 %804
  %v807 = vmul.f32 %v789, %v805
  %s808 = scalar_lea.vmem [#allocation2], 48
  %v809 = vld [vmem:[%s808] sm:$0xff]
  %811 = vrot.lane.b32.xlu0 %v807, 64
  %v812 = vpop.permute.xlu0 %811
  %v813 = vsel %vm195, %v812, 0
  %815 = vmatprep.subr.mxu0 0.0
  %816 = vmatpush1.msra.mxu0 %v188
  %817 = vmatprep.subr.mxu0 0.0
  %818 = vmatpush1.msra.mxu0 %v189
  %819 = vmatprep.subr.mxu0 0.0
  %820 = vmatpush1.msra.mxu0 %v190
  %821 = vmatprep.subr.mxu0 0.0
  %822 = vmatpush1.msra.mxu0 %v191
  %823 = vmatprep.subr.mxu0 0.0
  %824 = vmatpush1.msra.mxu0 0.0
  %825 = vmatprep.subr.mxu0 0.0
  %826 = vmatpush1.msra.mxu0 0.0
  %827 = vmatprep.subr.mxu0 0.0
  %828 = vmatpush1.msra.mxu0 0.0
  %829 = vmatprep.subr.mxu0 0.0
  %830 = vmatpush1.msra.mxu0 0.0
  %831 = vmatprep.subr.mxu0 0.0
  %832 = vmatpush1.msra.mxu0 0.0
  %833 = vmatprep.subr.mxu0 0.0
  %834 = vmatpush1.msra.mxu0 0.0
  %835 = vmatprep.subr.mxu0 0.0
  %836 = vmatpush1.msra.mxu0 0.0
  %837 = vmatprep.subr.mxu0 0.0
  %838 = vmatpush1.msra.mxu0 0.0
  %839 = vmatprep.subr.mxu0 0.0
  %840 = vmatpush1.msra.mxu0 0.0
  %841 = vmatprep.subr.mxu0 0.0
  %842 = vmatpush1.msra.mxu0 0.0
  %843 = vmatprep.subr.mxu0 0.0
  %844 = vmatpush1.msra.mxu0 0.0
  %845 = vmatprep.subr.mxu0 0.0
  %846 = vmatpush1.msra.mxu0 0.0
  %847 = vmatprep.subr.mxu0 0.0
  %848 = vmatpush1.msra.mxu0 0.0
  %849 = vmatprep.subr.mxu0 0.0
  %850 = vmatpush1.msra.mxu0 0.0
  %851 = vmatprep.subr.mxu0 0.0
  %852 = vmatpush1.msra.mxu0 0.0
  %853 = vmatprep.subr.mxu0 0.0
  %854 = vmatpush1.msra.mxu0 0.0
  %855 = vmatprep.subr.mxu0 0.0
  %856 = vmatpush1.msra.mxu0 0.0
  %857 = vmatprep.subr.mxu0 0.0
  %858 = vmatpush1.msra.mxu0 0.0
  %859 = vmatprep.subr.mxu0 0.0
  %860 = vmatpush1.msra.mxu0 0.0
  %861 = vmatprep.subr.mxu0 0.0
  %862 = vmatpush1.msra.mxu0 0.0
  %863 = vmatprep.subr.mxu0 0.0
  %864 = vmatpush1.msra.mxu0 0.0
  %865 = vmatprep.subr.mxu0 0.0
  %866 = vmatpush1.msra.mxu0 0.0
  %867 = vmatprep.subr.mxu0 0.0
  %868 = vmatpush1.msra.mxu0 0.0
  %869 = vmatprep.subr.mxu0 0.0
  %870 = vmatpush1.msra.mxu0 0.0
  %871 = vmatprep.subr.mxu0 0.0
  %872 = vmatpush1.msra.mxu0 0.0
  %873 = vmatprep.subr.mxu0 0.0
  %874 = vmatpush1.msra.mxu0 0.0
  %875 = vmatprep.subr.mxu0 0.0
  %876 = vmatpush1.msra.mxu0 0.0
  %877 = vmatprep.subr.mxu0 0.0
  %878 = vmatpush1.msra.mxu0 0.0
  %879 = vmatprep.mubr.f32.mxu0 0.0
  %880 = vmatmul.mubr.f32.gmra.mrb[0].mxu0 %v813
  %v881 = vpop.f32.mrb[0].mxu0
  %v882 = vadd.f32 0.0, %v881
  %v883 = vpop.f32.mrb[0].mxu0
  %884 = vdwg.mxu0
  %v885 = vadd.f32 %v809, %v882
  %v886 = vxor.u32 %v885, 2147483648
  %v887 = vmul.f32 %v886, 1.442695
  %v888 = vpow.pop %v887
  %v889 = vadd.f32 %v888, 1.0
  %v890 = vrcp.pop %v889
  %v891 = vmul.f32 1.0, %v890
  %v892 = vtanh.pop %v885
  %v893 = vmul.f32 %v891, %v801
  %895 = vrot.lane.b32.xlu0 %v892, 32
  %v896 = vpop.permute.xlu0 %895
  %v898 = vmul.f32 %v891, %v896
  %900 = vrot.lane.b32.xlu0 %v898, 32
  %v901 = vpop.permute.xlu0 %900
  %v903 = vadd.f32 %v893, %v901
  %v904 = vtanh.pop %v903
  %906 = vrot.lane.b32.xlu0 %v904, 32
  %v907 = vpop.permute.xlu0 %906
  %v909 = vmul.f32 %v891, %v907
  %s910 = scalar_lea.vmem [#allocation2], 56
  %v911 = vld [vmem:[%s910] sm:$0xff]
  %913 = vrot.lane.b32.xlu0 %v909, 64
  %v914 = vpop.permute.xlu0 %913
  %v915 = vsel %vm195, %v914, 0
  %917 = vmatprep.subr.mxu0 0.0
  %918 = vmatpush1.msra.mxu0 %v188
  %919 = vmatprep.subr.mxu0 0.0
  %920 = vmatpush1.msra.mxu0 %v189
  %921 = vmatprep.subr.mxu0 0.0
  %922 = vmatpush1.msra.mxu0 %v190
  %923 = vmatprep.subr.mxu0 0.0
  %924 = vmatpush1.msra.mxu0 %v191
  %925 = vmatprep.subr.mxu0 0.0
  %926 = vmatpush1.msra.mxu0 0.0
  %927 = vmatprep.subr.mxu0 0.0
  %928 = vmatpush1.msra.mxu0 0.0
  %929 = vmatprep.subr.mxu0 0.0
  %930 = vmatpush1.msra.mxu0 0.0
  %931 = vmatprep.subr.mxu0 0.0
  %932 = vmatpush1.msra.mxu0 0.0
  %933 = vmatprep.subr.mxu0 0.0
  %934 = vmatpush1.msra.mxu0 0.0
  %935 = vmatprep.subr.mxu0 0.0
  %936 = vmatpush1.msra.mxu0 0.0
  %937 = vmatprep.subr.mxu0 0.0
  %938 = vmatpush1.msra.mxu0 0.0
  %939 = vmatprep.subr.mxu0 0.0
  %940 = vmatpush1.msra.mxu0 0.0
  %941 = vmatprep.subr.mxu0 0.0
  %942 = vmatpush1.msra.mxu0 0.0
  %943 = vmatprep.subr.mxu0 0.0
  %944 = vmatpush1.msra.mxu0 0.0
  %945 = vmatprep.subr.mxu0 0.0
  %946 = vmatpush1.msra.mxu0 0.0
  %947 = vmatprep.subr.mxu0 0.0
  %948 = vmatpush1.msra.mxu0 0.0
  %949 = vmatprep.subr.mxu0 0.0
  %950 = vmatpush1.msra.mxu0 0.0
  %951 = vmatprep.subr.mxu0 0.0
  %952 = vmatpush1.msra.mxu0 0.0
  %953 = vmatprep.subr.mxu0 0.0
  %954 = vmatpush1.msra.mxu0 0.0
  %955 = vmatprep.subr.mxu0 0.0
  %956 = vmatpush1.msra.mxu0 0.0
  %957 = vmatprep.subr.mxu0 0.0
  %958 = vmatpush1.msra.mxu0 0.0
  %959 = vmatprep.subr.mxu0 0.0
  %960 = vmatpush1.msra.mxu0 0.0
  %961 = vmatprep.subr.mxu0 0.0
  %962 = vmatpush1.msra.mxu0 0.0
  %963 = vmatprep.subr.mxu0 0.0
  %964 = vmatpush1.msra.mxu0 0.0
  %965 = vmatprep.subr.mxu0 0.0
  %966 = vmatpush1.msra.mxu0 0.0
  %967 = vmatprep.subr.mxu0 0.0
  %968 = vmatpush1.msra.mxu0 0.0
  %969 = vmatprep.subr.mxu0 0.0
  %970 = vmatpush1.msra.mxu0 0.0
  %971 = vmatprep.subr.mxu0 0.0
  %972 = vmatpush1.msra.mxu0 0.0
  %973 = vmatprep.subr.mxu0 0.0
  %974 = vmatpush1.msra.mxu0 0.0
  %975 = vmatprep.subr.mxu0 0.0
  %976 = vmatpush1.msra.mxu0 0.0
  %977 = vmatprep.subr.mxu0 0.0
  %978 = vmatpush1.msra.mxu0 0.0
  %979 = vmatprep.subr.mxu0 0.0
  %980 = vmatpush1.msra.mxu0 0.0
  %981 = vmatprep.mubr.f32.mxu0 0.0
  %982 = vmatmul.mubr.f32.gmra.mrb[0].mxu0 %v915
  %v983 = vpop.f32.mrb[0].mxu0
  %v984 = vadd.f32 0.0, %v983
  %v985 = vpop.f32.mrb[0].mxu0
  %986 = vdwg.mxu0
  %v987 = vadd.f32 %v911, %v984
  %v988 = vxor.u32 %v987, 2147483648
  %v989 = vmul.f32 %v988, 1.442695
  %v990 = vpow.pop %v989
  %v991 = vadd.f32 %v990, 1.0
  %v992 = vrcp.pop %v991
  %v993 = vmul.f32 1.0, %v992
  %v994 = vtanh.pop %v987
  %v995 = vmul.f32 %v993, %v903
  %997 = vrot.lane.b32.xlu0 %v994, 32
  %v998 = vpop.permute.xlu0 %997
  %v1000 = vmul.f32 %v993, %v998
  %1002 = vrot.lane.b32.xlu0 %v1000, 32
  %v1003 = vpop.permute.xlu0 %1002
  %v1005 = vadd.f32 %v995, %v1003
  %v1006 = vtanh.pop %v1005
  %1008 = vrot.lane.b32.xlu0 %v1006, 32
  %v1009 = vpop.permute.xlu0 %1008
  %v1011 = vmul.f32 %v993, %v1009
  %1013 = vrot.lane.b32.xlu0 %v1011, 64
  %v1014 = vpop.permute.xlu0 %1013
  %1016 = vst.msk [vmem:[#allocation3] sm:$0xff] %vm195, %v1014
  %1018 = vrot.lane.b32.xlu0 %v1005, 96
  %v1019 = vpop.permute.xlu0 %1018
  %1021 = vst.msk [vmem:[#allocation4] sm:$0xff] %vm195, %v1019
  // Predicated region
  $region30: #{_forward_jit.1} parent=0 // pred_check
    %p1022 = pneg %p23
  $region31: #{_forward_jit.1} parent=0 // pred_check_branch
    %1024 = sbr.rel (%p1022) target = $region33
  $region32: #{_forward_jit.1} parent=0 // pred_region
    %v1025 = vld [vmem:[#allocation3] sm:$0xff]
    %v1026 = vld [vmem:[%s4] sm:$0xff]
    %v1027 = vld [vmem:[%s4 + $0x8] sm:$0xff]
    %v1028 = vld [vmem:[%s4 + $0x10] sm:$0xff]
    %v1029 = vld [vmem:[%s4 + $0x18] sm:$0xff]
    %v1030 = vld [vmem:[%s5] sm:$0x1]
    %v1032 = vlaneseq
    %v1033 = vshrl.u32 %v1032, 7
    %v1034 = vsub.s32 0, %v1033
    %v1035 = vrot.slane %v1030, %v1034
    %v1038 = vsel %vm195, %v1025, 0
    %1040 = vmatprep.subr.mxu0 0.0
    %1041 = vmatpush1.msra.mxu0 %v1026
    %1042 = vmatprep.subr.mxu0 0.0
    %1043 = vmatpush1.msra.mxu0 %v1027
    %1044 = vmatprep.subr.mxu0 0.0
    %1045 = vmatpush1.msra.mxu0 %v1028
    %1046 = vmatprep.subr.mxu0 0.0
    %1047 = vmatpush1.msra.mxu0 %v1029
    %1048 = vmatprep.subr.mxu0 0.0
    %1049 = vmatpush1.msra.mxu0 0.0
    %1050 = vmatprep.subr.mxu0 0.0
    %1051 = vmatpush1.msra.mxu0 0.0
    %1052 = vmatprep.subr.mxu0 0.0
    %1053 = vmatpush1.msra.mxu0 0.0
    %1054 = vmatprep.subr.mxu0 0.0
    %1055 = vmatpush1.msra.mxu0 0.0
    %1056 = vmatprep.subr.mxu0 0.0
    %1057 = vmatpush1.msra.mxu0 0.0
    %1058 = vmatprep.subr.mxu0 0.0
    %1059 = vmatpush1.msra.mxu0 0.0
    %1060 = vmatprep.subr.mxu0 0.0
    %1061 = vmatpush1.msra.mxu0 0.0
    %1062 = vmatprep.subr.mxu0 0.0
    %1063 = vmatpush1.msra.mxu0 0.0
    %1064 = vmatprep.subr.mxu0 0.0
    %1065 = vmatpush1.msra.mxu0 0.0
    %1066 = vmatprep.subr.mxu0 0.0
    %1067 = vmatpush1.msra.mxu0 0.0
    %1068 = vmatprep.subr.mxu0 0.0
    %1069 = vmatpush1.msra.mxu0 0.0
    %1070 = vmatprep.subr.mxu0 0.0
    %1071 = vmatpush1.msra.mxu0 0.0
    %1072 = vmatprep.subr.mxu0 0.0
    %1073 = vmatpush1.msra.mxu0 0.0
    %1074 = vmatprep.subr.mxu0 0.0
    %1075 = vmatpush1.msra.mxu0 0.0
    %1076 = vmatprep.subr.mxu0 0.0
    %1077 = vmatpush1.msra.mxu0 0.0
    %1078 = vmatprep.subr.mxu0 0.0
    %1079 = vmatpush1.msra.mxu0 0.0
    %1080 = vmatprep.subr.mxu0 0.0
    %1081 = vmatpush1.msra.mxu0 0.0
    %1082 = vmatprep.subr.mxu0 0.0
    %1083 = vmatpush1.msra.mxu0 0.0
    %1084 = vmatprep.subr.mxu0 0.0
    %1085 = vmatpush1.msra.mxu0 0.0
    %1086 = vmatprep.subr.mxu0 0.0
    %1087 = vmatpush1.msra.mxu0 0.0
    %1088 = vmatprep.subr.mxu0 0.0
    %1089 = vmatpush1.msra.mxu0 0.0
    %1090 = vmatprep.subr.mxu0 0.0
    %1091 = vmatpush1.msra.mxu0 0.0
    %1092 = vmatprep.subr.mxu0 0.0
    %1093 = vmatpush1.msra.mxu0 0.0
    %1094 = vmatprep.subr.mxu0 0.0
    %1095 = vmatpush1.msra.mxu0 0.0
    %1096 = vmatprep.subr.mxu0 0.0
    %1097 = vmatpush1.msra.mxu0 0.0
    %1098 = vmatprep.subr.mxu0 0.0
    %1099 = vmatpush1.msra.mxu0 0.0
    %1100 = vmatprep.subr.mxu0 0.0
    %1101 = vmatpush1.msra.mxu0 0.0
    %1102 = vmatprep.subr.mxu0 0.0
    %1103 = vmatpush1.msra.mxu0 0.0
    %1104 = vmatprep.mubr.f32.mxu0 0.0
    %1105 = vmatmul.mubr.f32.gmra.mrb[0].mxu0 %v1038
    %v1106 = vpop.f32.mrb[0].mxu0
    %v1107 = vadd.f32 %v1035, %v1106
    %v1108 = vpop.f32.mrb[0].mxu0
    %1109 = vdwg.mxu0
    %1110 = vst [vmem:[%s6] sm:$0xff] %v1107
  $region33: #{_forward_jit.1} parent=0 // pred_fallthru
    _
  // Predicated region
  $region34: #{_forward_jit.1} parent=0 // pred_check
    _
  $region35: #{_forward_jit.1} parent=0 // pred_check_branch
    %1112 = sbr.rel (0) target = $region37
  $region36: #{_forward_jit.1} parent=0 // pred_region
    _
  $region37: #{_forward_jit.1} parent=0 // pred_fallthru
    _
  // Predicated region
  $region38: #{_forward_jit.1} parent=0 // pred_check
    _
  $region39: #{_forward_jit.1} parent=0 // pred_check_branch
    %1114 = sbr.rel (0) target = $region41
  $region40: #{_forward_jit.1} parent=0 // pred_region
    _
  $region41: #{_forward_jit.1} parent=0 // pred_fallthru
    _

// kernel: _forward_jit.1
$region0: #{_forward_jit.1}
  #allocation0 [shape = 'u32[]', space=smem, size = 0x4, offset = 0x4, fixed_abs, tag = 'smem constant byte address 0x4 - core index']
  #allocation1 [shape = 'u32[144,128]{1,0:T(1,128)}', space=vmem, size = 0x12000, scoped, tag = 'internal scratch']
  #allocation2 [shape = 'f32[64,128]{1,0:T(8,128)}', space=vmem, size = 0x8000, scoped, tag = 'scratch operand']
  #allocation3 [shape = 'f32[8,32]{1,0:T(8,128)}', space=vmem, size = 0x1000, scoped, tag = 'scratch operand']
  #allocation4 [shape = 'f32[8,32]{1,0:T(8,128)}', space=vmem, size = 0x1000, scoped, tag = 'scratch operand']
  %s0 = inlined_call_operand.vmem [shape: f32[8,8,5], index: 0, kind: input, shape index: {}]
  %s1 = inlined_call_operand.vmem [shape: f32[5,128], index: 1, kind: input, shape index: {}]
  %s2 = inlined_call_operand.vmem [shape: f32[1,128], index: 2, kind: input, shape index: {}]
  %s3 = inlined_call_operand.vmem [shape: f32[32,128], index: 3, kind: input, shape index: {}]
  %s4 = inlined_call_operand.vmem [shape: f32[32,128], index: 4, kind: input, shape index: {}]
  %s5 = inlined_call_operand.vmem [shape: f32[1,128], index: 5, kind: input, shape index: {}]
  %s6 = inlined_call_operand.vmem [shape: f32[8,128], index: 6, kind: output, shape index: {}]
  %s7 = sld [smem:[#allocation0]]
  $region42: #{_forward_jit.1} parent=0
    _
  %s9 = ssub.s32 1, %s7
  %s10 = scalar_select 0, %s9, %s7
  // Predicated region
  $region2: #{_forward_jit.1} parent=0 // pred_check
    _
  $region3: #{_forward_jit.1} parent=0 // pred_check_branch
    %12 = sbr.rel (0) target = $region5
  $region4: #{_forward_jit.1} parent=0 // pred_region
    _
  $region5: #{_forward_jit.1} parent=0 // pred_fallthru
    _
  // Predicated region
  $region6: #{_forward_jit.1} parent=0 // pred_check
    _
  $region7: #{_forward_jit.1} parent=0 // pred_check_branch
    %14 = sbr.rel (0) target = $region9
  $region8: #{_forward_jit.1} parent=0 // pred_region
    _
  $region9: #{_forward_jit.1} parent=0 // pred_fallthru
    _
  // Predicated region
  $region10: #{_forward_jit.1} parent=0 // pred_check
    _
  $region11: #{_forward_jit.1} parent=0 // pred_check_branch
    %16 = sbr.rel (0) target = $region13
  $region12: #{_forward_jit.1} parent=0 // pred_region
    _
  $region13: #{_forward_jit.1} parent=0 // pred_fallthru
    _
  // Predicated region
  $region14: #{_forward_jit.1} parent=0 // pred_check
    _
  $region15: #{_forward_jit.1} parent=0 // pred_check_branch
    %18 = sbr.rel (0) target = $region17
  $region16: #{_forward_jit.1} parent=0 // pred_region
    _
  $region17: #{_forward_jit.1} parent=0 // pred_fallthru
    _
  // Predicated region
  $region18: #{_forward_jit.1} parent=0 // pred_check
    _
  $region19: #{_forward_jit.1} parent=0 // pred_check_branch
    %20 = sbr.rel (0) target = $region21
  $region20: #{_forward_jit.1} parent=0 // pred_region
    _
  $region21: #{_forward_jit.1} parent=0 // pred_fallthru
    _
  // Predicated region
  $region22: #{_forward_jit.1} parent=0 // pred_check
    _
  $region23: #{_forward_jit.1} parent=0 // pred_check_branch
    %22 = sbr.rel (0) target = $region25
  $region24: #{_forward_jit.1} parent=0 // pred_region
    _
  $region25: #{_forward_jit.1} parent=0 // pred_fallthru
    _
  %p23 = scmp.eq.s32.totalorder 0, 0
  // Predicated region
  $region26: #{_forward_jit.1} parent=0 // pred_check
    %p24 = pneg %p23
  $region27: #{_forward_jit.1} parent=0 // pred_check_branch
    %26 = sbr.rel (%p24) target = $region29
  $region28: #{_forward_jit.1} parent=0 // pred_region
    %vm27 = vcmask 261120
    %28 = vst.msk [vmem:[#allocation3] sm:$0xff] %vm27, 0.0
    %29 = vst.msk [vmem:[#allocation4] sm:$0xff] %vm27, 0.0
  $region29: #{_forward_jit.1} parent=0 // pred_fallthru
    _
  %v30 = vld [vmem:[%s0] sm:$0xff]
  %v31 = vld [vmem:[%s0 + $0x8] sm:$0xff]
  %v32 = vld [vmem:[%s0 + $0x10] sm:$0xff]
  %v33 = vld [vmem:[%s0 + $0x18] sm:$0xff]
  %v34 = vld [vmem:[%s0 + $0x20] sm:$0xff]
  %v35 = vld [vmem:[%s0 + $0x28] sm:$0xff]
  %v36 = vld [vmem:[%s0 + $0x30] sm:$0xff]
  %v37 = vld [vmem:[%s0 + $0x38] sm:$0xff]
  %v38 = vld [vmem:[%s1] sm:$0x1f]
  %v39 = vld [vmem:[%s2] sm:$0x1]
  %v41 = vlaneseq
  %v42 = vshrl.u32 %v41, 7
  %v43 = vsub.s32 0, %v42
  %v44 = vrot.slane %v39, %v43
  %vm46 = vcmask 39936
  %v48 = vsel %vm46, %v30, 0
  %v51 = vsel %vm46, %v31, 0
  %v54 = vsel %vm46, %v32, 0
  %v57 = vsel %vm46, %v33, 0
  %v60 = vsel %vm46, %v34, 0
  %v63 = vsel %vm46, %v35, 0
  %v66 = vsel %vm46, %v36, 0
  %v69 = vsel %vm46, %v37, 0
  %vm71 = vcmask 1044480
  %v73 = vsel %vm71, %v38, 0
  %75 = vmatprep.subr.mxu0 0.0
  %76 = vmatpush1.msra.mxu0 %v73
  %77 = vmatprep.subr.mxu0 0.0
  %78 = vmatpush1.msra.mxu0 0.0
  %79 = vmatprep.subr.mxu0 0.0
  %80 = vmatpush1.msra.mxu0 0.0
  %81 = vmatprep.subr.mxu0 0.0
  %82 = vmatpush1.msra.mxu0 0.0
  %83 = vmatprep.subr.mxu0 0.0
  %84 = vmatpush1.msra.mxu0 0.0
  %85 = vmatprep.subr.mxu0 0.0
  %86 = vmatpush1.msra.mxu0 0.0
  %87 = vmatprep.subr.mxu0 0.0
  %88 = vmatpush1.msra.mxu0 0.0
  %89 = vmatprep.subr.mxu0 0.0
  %90 = vmatpush1.msra.mxu0 0.0
  %91 = vmatprep.subr.mxu0 0.0
  %92 = vmatpush1.msra.mxu0 0.0
  %93 = vmatprep.subr.mxu0 0.0
  %94 = vmatpush1.msra.mxu0 0.0
  %95 = vmatprep.subr.mxu0 0.0
  %96 = vmatpush1.msra.mxu0 0.0
  %97 = vmatprep.subr.mxu0 0.0
  %98 = vmatpush1.msra.mxu0 0.0
  %99 = vmatprep.subr.mxu0 0.0
  %100 = vmatpush1.msra.mxu0 0.0
  %101 = vmatprep.subr.mxu0 0.0
  %102 = vmatpush1.msra.mxu0 0.0
  %103 = vmatprep.subr.mxu0 0.0
  %104 = vmatpush1.msra.mxu0 0.0
  %105 = vmatprep.subr.mxu0 0.0
  %106 = vmatpush1.msra.mxu0 0.0
  %107 = vmatprep.subr.mxu0 0.0
  %108 = vmatpush1.msra.mxu0 0.0
  %109 = vmatprep.subr.mxu0 0.0
  %110 = vmatpush1.msra.mxu0 0.0
  %111 = vmatprep.subr.mxu0 0.0
  %112 = vmatpush1.msra.mxu0 0.0
  %113 = vmatprep.subr.mxu0 0.0
  %114 = vmatpush1.msra.mxu0 0.0
  %115 = vmatprep.subr.mxu0 0.0
  %116 = vmatpush1.msra.mxu0 0.0
  %117 = vmatprep.subr.mxu0 0.0
  %118 = vmatpush1.msra.mxu0 0.0
  %119 = vmatprep.subr.mxu0 0.0
  %120 = vmatpush1.msra.mxu0 0.0
  %121 = vmatprep.subr.mxu0 0.0
  %122 = vmatpush1.msra.mxu0 0.0
  %123 = vmatprep.subr.mxu0 0.0
  %124 = vmatpush1.msra.mxu0 0.0
  %125 = vmatprep.subr.mxu0 0.0
  %126 = vmatpush1.msra.mxu0 0.0
  %127 = vmatprep.subr.mxu0 0.0
  %128 = vmatpush1.msra.mxu0 0.0
  %129 = vmatprep.subr.mxu0 0.0
  %130 = vmatpush1.msra.mxu0 0.0
  %131 = vmatprep.subr.mxu0 0.0
  %132 = vmatpush1.msra.mxu0 0.0
  %133 = vmatprep.subr.mxu0 0.0
  %134 = vmatpush1.msra.mxu0 0.0
  %135 = vmatprep.subr.mxu0 0.0
  %136 = vmatpush1.msra.mxu0 0.0
  %137 = vmatprep.subr.mxu0 0.0
  %138 = vmatpush1.msra.mxu0 0.0
  %139 = vmatprep.mubr.f32.mxu0 0.0
  %140 = vmatmul.mubr.f32.gmra.mrb[0].mxu0 %v48
  %v141 = vpop.f32.mrb[0].mxu0
  %v142 = vadd.f32 %v44, %v141
  %v143 = vpop.f32.mrb[0].mxu0
  %144 = vmatprep.mubr.f32.mxu0 0.0
  %145 = vmatmul.mubr.f32.gmra.mrb[0].mxu0 %v51
  %v146 = vpop.f32.mrb[0].mxu0
  %v147 = vadd.f32 %v44, %v146
  %v148 = vpop.f32.mrb[0].mxu0
  %149 = vmatprep.mubr.f32.mxu0 0.0
  %150 = vmatmul.mubr.f32.gmra.mrb[0].mxu0 %v54
  %v151 = vpop.f32.mrb[0].mxu0
  %v152 = vadd.f32 %v44, %v151
  %v153 = vpop.f32.mrb[0].mxu0
  %154 = vmatprep.mubr.f32.mxu0 0.0
  %155 = vmatmul.mubr.f32.gmra.mrb[0].mxu0 %v57
  %v156 = vpop.f32.mrb[0].mxu0
  %v157 = vadd.f32 %v44, %v156
  %v158 = vpop.f32.mrb[0].mxu0
  %159 = vmatprep.mubr.f32.mxu0 0.0
  %160 = vmatmul.mubr.f32.gmra.mrb[0].mxu0 %v60
  %v161 = vpop.f32.mrb[0].mxu0
  %v162 = vadd.f32 %v44, %v161
  %v163 = vpop.f32.mrb[0].mxu0
  %164 = vmatprep.mubr.f32.mxu0 0.0
  %165 = vmatmul.mubr.f32.gmra.mrb[0].mxu0 %v63
  %v166 = vpop.f32.mrb[0].mxu0
  %v167 = vadd.f32 %v44, %v166
  %v168 = vpop.f32.mrb[0].mxu0
  %169 = vmatprep.mubr.f32.mxu0 0.0
  %170 = vmatmul.mubr.f32.gmra.mrb[0].mxu0 %v66
  %v171 = vpop.f32.mrb[0].mxu0
  %v172 = vadd.f32 %v44, %v171
  %v173 = vpop.f32.mrb[0].mxu0
  %174 = vmatprep.mubr.f32.mxu0 0.0
  %175 = vmatmul.mubr.f32.gmra.mrb[0].mxu0 %v69
  %v176 = vpop.f32.mrb[0].mxu0
  %v177 = vadd.f32 %v44, %v176
  %v178 = vpop.f32.mrb[0].mxu0
  %179 = vdwg.mxu0
  %180 = vst [vmem:[#allocation2] sm:$0xff] %v142
  %181 = vst [vmem:[#allocation2 + $0x8] sm:$0xff] %v147
  %182 = vst [vmem:[#allocation2 + $0x10] sm:$0xff] %v152
  %183 = vst [vmem:[#allocation2 + $0x18] sm:$0xff] %v157
  %184 = vst [vmem:[#allocation2 + $0x20] sm:$0xff] %v162
  %185 = vst [vmem:[#allocation2 + $0x28] sm:$0xff] %v167
  %186 = vst [vmem:[#allocation2 + $0x30] sm:$0xff] %v172
  %187 = vst [vmem:[#allocation2 + $0x38] sm:$0xff] %v177
  %v188 = vld [vmem:[%s3] sm:$0xff]
  %v189 = vld [vmem:[%s3 + $0x8] sm:$0xff]
  %v190 = vld [vmem:[%s3 + $0x10] sm:$0xff]
  %v191 = vld [vmem:[%s3 + $0x18] sm:$0xff]
  %v192 = vld [vmem:[#allocation3] sm:$0xff]
  %v193 = vld [vmem:[#allocation4] sm:$0xff]
  %v194 = vld [vmem:[#allocation2] sm:$0xff]
  %vm195 = vcmask 261120
  %v197 = vsel %vm195, %v192, 0
  %199 = vmatprep.subr.mxu0 0.0
  %200 = vmatpush1.msra.mxu0 %v188
  %201 = vmatprep.subr.mxu0 0.0
  %202 = vmatpush1.msra.mxu0 %v189
  %203 = vmatprep.subr.mxu0 0.0
  %204 = vmatpush1.msra.mxu0 %v190
  %205 = vmatprep.subr.mxu0 0.0
  %206 = vmatpush1.msra.mxu0 %v191
  %207 = vmatprep.subr.mxu0 0.0
  %208 = vmatpush1.msra.mxu0 0.0
  %209 = vmatprep.subr.mxu0 0.0
  %210 = vmatpush1.msra.mxu0 0.0
  %211 = vmatprep.subr.mxu0 0.0
  %212 = vmatpush1.msra.mxu0 0.0
  %213 = vmatprep.subr.mxu0 0.0
  %214 = vmatpush1.msra.mxu0 0.0
  %215 = vmatprep.subr.mxu0 0.0
  %216 = vmatpush1.msra.mxu0 0.0
  %217 = vmatprep.subr.mxu0 0.0
  %218 = vmatpush1.msra.mxu0 0.0
  %219 = vmatprep.subr.mxu0 0.0
  %220 = vmatpush1.msra.mxu0 0.0
  %221 = vmatprep.subr.mxu0 0.0
  %222 = vmatpush1.msra.mxu0 0.0
  %223 = vmatprep.subr.mxu0 0.0
  %224 = vmatpush1.msra.mxu0 0.0
  %225 = vmatprep.subr.mxu0 0.0
  %226 = vmatpush1.msra.mxu0 0.0
  %227 = vmatprep.subr.mxu0 0.0
  %228 = vmatpush1.msra.mxu0 0.0
  %229 = vmatprep.subr.mxu0 0.0
  %230 = vmatpush1.msra.mxu0 0.0
  %231 = vmatprep.subr.mxu0 0.0
  %232 = vmatpush1.msra.mxu0 0.0
  %233 = vmatprep.subr.mxu0 0.0
  %234 = vmatpush1.msra.mxu0 0.0
  %235 = vmatprep.subr.mxu0 0.0
  %236 = vmatpush1.msra.mxu0 0.0
  %237 = vmatprep.subr.mxu0 0.0
  %238 = vmatpush1.msra.mxu0 0.0
  %239 = vmatprep.subr.mxu0 0.0
  %240 = vmatpush1.msra.mxu0 0.0
  %241 = vmatprep.subr.mxu0 0.0
  %242 = vmatpush1.msra.mxu0 0.0
  %243 = vmatprep.subr.mxu0 0.0
  %244 = vmatpush1.msra.mxu0 0.0
  %245 = vmatprep.subr.mxu0 0.0
  %246 = vmatpush1.msra.mxu0 0.0
  %247 = vmatprep.subr.mxu0 0.0
  %248 = vmatpush1.msra.mxu0 0.0
  %249 = vmatprep.subr.mxu0 0.0
  %250 = vmatpush1.msra.mxu0 0.0
  %251 = vmatprep.subr.mxu0 0.0
  %252 = vmatpush1.msra.mxu0 0.0
  %253 = vmatprep.subr.mxu0 0.0
  %254 = vmatpush1.msra.mxu0 0.0
  %255 = vmatprep.subr.mxu0 0.0
  %256 = vmatpush1.msra.mxu0 0.0
  %257 = vmatprep.subr.mxu0 0.0
  %258 = vmatpush1.msra.mxu0 0.0
  %259 = vmatprep.subr.mxu0 0.0
  %260 = vmatpush1.msra.mxu0 0.0
  %261 = vmatprep.subr.mxu0 0.0
  %262 = vmatpush1.msra.mxu0 0.0
  %263 = vmatprep.mubr.f32.mxu0 0.0
  %264 = vmatmul.mubr.f32.gmra.mrb[0].mxu0 %v197
  %v265 = vpop.f32.mrb[0].mxu0
  %v266 = vadd.f32 0.0, %v265
  %v267 = vpop.f32.mrb[0].mxu0
  %268 = vdwg.mxu0
  %v269 = vadd.f32 %v194, %v266
  %v270 = vxor.u32 %v269, 2147483648
  %v271 = vmul.f32 %v270, 1.442695
  %v272 = vpow.pop %v271
  %v273 = vadd.f32 %v272, 1.0
  %v274 = vrcp.pop %v273
  %v275 = vmul.f32 1.0, %v274
  %v276 = vtanh.pop %v269
  %278 = vrot.lane.b32.xlu0 %v193, 32
  %v279 = vpop.permute.xlu0 %278
  %v281 = vmul.f32 %v275, %v279
  %283 = vrot.lane.b32.xlu0 %v276, 32
  %v284 = vpop.permute.xlu0 %283
  %v286 = vmul.f32 %v275, %v284
  %288 = vrot.lane.b32.xlu0 %v286, 32
  %v289 = vpop.permute.xlu0 %288
  %v291 = vadd.f32 %v281, %v289
  %v292 = vtanh.pop %v291
  %294 = vrot.lane.b32.xlu0 %v292, 32
  %v295 = vpop.permute.xlu0 %294
  %v297 = vmul.f32 %v275, %v295
  %s298 = scalar_lea.vmem [#allocation2], 8
  %v299 = vld [vmem:[%s298] sm:$0xff]
  %301 = vrot.lane.b32.xlu0 %v297, 64
  %v302 = vpop.permute.xlu0 %301
  %v303 = vsel %vm195, %v302, 0
  %305 = vmatprep.subr.mxu0 0.0
  %306 = vmatpush1.msra.mxu0 %v188
  %307 = vmatprep.subr.mxu0 0.0
  %308 = vmatpush1.msra.mxu0 %v189
  %309 = vmatprep.subr.mxu0 0.0
  %310 = vmatpush1.msra.mxu0 %v190
  %311 = vmatprep.subr.mxu0 0.0
  %312 = vmatpush1.msra.mxu0 %v191
  %313 = vmatprep.subr.mxu0 0.0
  %314 = vmatpush1.msra.mxu0 0.0
  %315 = vmatprep.subr.mxu0 0.0
  %316 = vmatpush1.msra.mxu0 0.0
  %317 = vmatprep.subr.mxu0 0.0
  %318 = vmatpush1.msra.mxu0 0.0
  %319 = vmatprep.subr.mxu0 0.0
  %320 = vmatpush1.msra.mxu0 0.0
  %321 = vmatprep.subr.mxu0 0.0
  %322 = vmatpush1.msra.mxu0 0.0
  %323 = vmatprep.subr.mxu0 0.0
  %324 = vmatpush1.msra.mxu0 0.0
  %325 = vmatprep.subr.mxu0 0.0
  %326 = vmatpush1.msra.mxu0 0.0
  %327 = vmatprep.subr.mxu0 0.0
  %328 = vmatpush1.msra.mxu0 0.0
  %329 = vmatprep.subr.mxu0 0.0
  %330 = vmatpush1.msra.mxu0 0.0
  %331 = vmatprep.subr.mxu0 0.0
  %332 = vmatpush1.msra.mxu0 0.0
  %333 = vmatprep.subr.mxu0 0.0
  %334 = vmatpush1.msra.mxu0 0.0
  %335 = vmatprep.subr.mxu0 0.0
  %336 = vmatpush1.msra.mxu0 0.0
  %337 = vmatprep.subr.mxu0 0.0
  %338 = vmatpush1.msra.mxu0 0.0
  %339 = vmatprep.subr.mxu0 0.0
  %340 = vmatpush1.msra.mxu0 0.0
  %341 = vmatprep.subr.mxu0 0.0
  %342 = vmatpush1.msra.mxu0 0.0
  %343 = vmatprep.subr.mxu0 0.0
  %344 = vmatpush1.msra.mxu0 0.0
  %345 = vmatprep.subr.mxu0 0.0
  %346 = vmatpush1.msra.mxu0 0.0
  %347 = vmatprep.subr.mxu0 0.0
  %348 = vmatpush1.msra.mxu0 0.0
  %349 = vmatprep.subr.mxu0 0.0
  %350 = vmatpush1.msra.mxu0 0.0
  %351 = vmatprep.subr.mxu0 0.0
  %352 = vmatpush1.msra.mxu0 0.0
  %353 = vmatprep.subr.mxu0 0.0
  %354 = vmatpush1.msra.mxu0 0.0
  %355 = vmatprep.subr.mxu0 0.0
  %356 = vmatpush1.msra.mxu0 0.0
  %357 = vmatprep.subr.mxu0 0.0
  %358 = vmatpush1.msra.mxu0 0.0
  %359 = vmatprep.subr.mxu0 0.0
  %360 = vmatpush1.msra.mxu0 0.0
  %361 = vmatprep.subr.mxu0 0.0
  %362 = vmatpush1.msra.mxu0 0.0
  %363 = vmatprep.subr.mxu0 0.0
  %364 = vmatpush1.msra.mxu0 0.0
  %365 = vmatprep.subr.mxu0 0.0
  %366 = vmatpush1.msra.mxu0 0.0
  %367 = vmatprep.subr.mxu0 0.0
  %368 = vmatpush1.msra.mxu0 0.0
  %369 = vmatprep.mubr.f32.mxu0 0.0
  %370 = vmatmul.mubr.f32.gmra.mrb[0].mxu0 %v303
  %v371 = vpop.f32.mrb[0].mxu0
  %v372 = vadd.f32 0.0, %v371
  %v373 = vpop.f32.mrb[0].mxu0
  %374 = vdwg.mxu0
  %v375 = vadd.f32 %v299, %v372
  %v376 = vxor.u32 %v375, 2147483648
  %v377 = vmul.f32 %v376, 1.442695
  %v378 = vpow.pop %v377
  %v379 = vadd.f32 %v378, 1.0
  %v380 = vrcp.pop %v379
  %v381 = vmul.f32 1.0, %v380
  %v382 = vtanh.pop %v375
  %v383 = vmul.f32 %v381, %v291
  %385 = vrot.lane.b32.xlu0 %v382, 32
  %v386 = vpop.permute.xlu0 %385
  %v388 = vmul.f32 %v381, %v386
  %390 = vrot.lane.b32.xlu0 %v388, 32
  %v391 = vpop.permute.xlu0 %390
  %v393 = vadd.f32 %v383, %v391
  %v394 = vtanh.pop %v393
  %396 = vrot.lane.b32.xlu0 %v394, 32
  %v397 = vpop.permute.xlu0 %396
  %v399 = vmul.f32 %v381, %v397
  %s400 = scalar_lea.vmem [#allocation2], 16
  %v401 = vld [vmem:[%s400] sm:$0xff]
  %403 = vrot.lane.b32.xlu0 %v399, 64
  %v404 = vpop.permute.xlu0 %403
  %v405 = vsel %vm195, %v404, 0
  %407 = vmatprep.subr.mxu0 0.0
  %408 = vmatpush1.msra.mxu0 %v188
  %409 = vmatprep.subr.mxu0 0.0
  %410 = vmatpush1.msra.mxu0 %v189
  %411 = vmatprep.subr.mxu0 0.0
  %412 = vmatpush1.msra.mxu0 %v190
  %413 = vmatprep.subr.mxu0 0.0
  %414 = vmatpush1.msra.mxu0 %v191
  %415 = vmatprep.subr.mxu0 0.0
  %416 = vmatpush1.msra.mxu0 0.0
  %417 = vmatprep.subr.mxu0 0.0
  %418 = vmatpush1.msra.mxu0 0.0
  %419 = vmatprep.subr.mxu0 0.0
  %420 = vmatpush1.msra.mxu0 0.0
  %421 = vmatprep.subr.mxu0 0.0
  %422 = vmatpush1.msra.mxu0 0.0
  %423 = vmatprep.subr.mxu0 0.0
  %424 = vmatpush1.msra.mxu0 0.0
  %425 = vmatprep.subr.mxu0 0.0
  %426 = vmatpush1.msra.mxu0 0.0
  %427 = vmatprep.subr.mxu0 0.0
  %428 = vmatpush1.msra.mxu0 0.0
  %429 = vmatprep.subr.mxu0 0.0
  %430 = vmatpush1.msra.mxu0 0.0
  %431 = vmatprep.subr.mxu0 0.0
  %432 = vmatpush1.msra.mxu0 0.0
  %433 = vmatprep.subr.mxu0 0.0
  %434 = vmatpush1.msra.mxu0 0.0
  %435 = vmatprep.subr.mxu0 0.0
  %436 = vmatpush1.msra.mxu0 0.0
  %437 = vmatprep.subr.mxu0 0.0
  %438 = vmatpush1.msra.mxu0 0.0
  %439 = vmatprep.subr.mxu0 0.0
  %440 = vmatpush1.msra.mxu0 0.0
  %441 = vmatprep.subr.mxu0 0.0
  %442 = vmatpush1.msra.mxu0 0.0
  %443 = vmatprep.subr.mxu0 0.0
  %444 = vmatpush1.msra.mxu0 0.0
  %445 = vmatprep.subr.mxu0 0.0
  %446 = vmatpush1.msra.mxu0 0.0
  %447 = vmatprep.subr.mxu0 0.0
  %448 = vmatpush1.msra.mxu0 0.0
  %449 = vmatprep.subr.mxu0 0.0
  %450 = vmatpush1.msra.mxu0 0.0
  %451 = vmatprep.subr.mxu0 0.0
  %452 = vmatpush1.msra.mxu0 0.0
  %453 = vmatprep.subr.mxu0 0.0
  %454 = vmatpush1.msra.mxu0 0.0
  %455 = vmatprep.subr.mxu0 0.0
  %456 = vmatpush1.msra.mxu0 0.0
  %457 = vmatprep.subr.mxu0 0.0
  %458 = vmatpush1.msra.mxu0 0.0
  %459 = vmatprep.subr.mxu0 0.0
  %460 = vmatpush1.msra.mxu0 0.0
  %461 = vmatprep.subr.mxu0 0.0
  %462 = vmatpush1.msra.mxu0 0.0
  %463 = vmatprep.subr.mxu0 0.0
  %464 = vmatpush1.msra.mxu0 0.0
  %465 = vmatprep.subr.mxu0 0.0
  %466 = vmatpush1.msra.mxu0 0.0
  %467 = vmatprep.subr.mxu0 0.0
  %468 = vmatpush1.msra.mxu0 0.0
  %469 = vmatprep.subr.mxu0 0.0
  %470 = vmatpush1.msra.mxu0 0.0
  %471 = vmatprep.mubr.f32.mxu0 0.0
  %472 = vmatmul.mubr.f32.gmra.mrb[0].mxu0 %v405
  %v473 = vpop.f32.mrb[0].mxu0
  %v474 = vadd.f32 0.0, %v473
  %v475 = vpop.f32.mrb[0].mxu0
  %476 = vdwg.mxu0
  %v477 = vadd.f32 %v401, %v474
  %v478 = vxor.u32 %v477, 2147483648
  %v479 = vmul.f32 %v478, 1.442695
  %v480 = vpow.pop %v479
  %v481 = vadd.f32 %v480, 1.0
  %v482 = vrcp.pop %v481
  %v483 = vmul.f32 1.0, %v482
  %v484 = vtanh.pop %v477
  %v485 = vmul.f32 %v483, %v393
  %487 = vrot.lane.b32.xlu0 %v484, 32
  %v488 = vpop.permute.xlu0 %487
  %v490 = vmul.f32 %v483, %v488
  %492 = vrot.lane.b32.xlu0 %v490, 32
  %v493 = vpop.permute.xlu0 %492
  %v495 = vadd.f32 %v485, %v493
  %v496 = vtanh.pop %v495
  %498 = vrot.lane.b32.xlu0 %v496, 32
  %v499 = vpop.permute.xlu0 %498
  %v501 = vmul.f32 %v483, %v499
  %s502 = scalar_lea.vmem [#allocation2], 24
  %v503 = vld [vmem:[%s502] sm:$0xff]
  %505 = vrot.lane.b32.xlu0 %v501, 64
  %v506 = vpop.permute.xlu0 %505
  %v507 = vsel %vm195, %v506, 0
  %509 = vmatprep.subr.mxu0 0.0
  %510 = vmatpush1.msra.mxu0 %v188
  %511 = vmatprep.subr.mxu0 0.0
  %512 = vmatpush1.msra.mxu0 %v189
  %513 = vmatprep.subr.mxu0 0.0
  %514 = vmatpush1.msra.mxu0 %v190
  %515 = vmatprep.subr.mxu0 0.0
  %516 = vmatpush1.msra.mxu0 %v191
  %517 = vmatprep.subr.mxu0 0.0
  %518 = vmatpush1.msra.mxu0 0.0
  %519 = vmatprep.subr.mxu0 0.0
  %520 = vmatpush1.msra.mxu0 0.0
  %521 = vmatprep.subr.mxu0 0.0
  %522 = vmatpush1.msra.mxu0 0.0
  %523 = vmatprep.subr.mxu0 0.0
  %524 = vmatpush1.msra.mxu0 0.0
  %525 = vmatprep.subr.mxu0 0.0
  %526 = vmatpush1.msra.mxu0 0.0
  %527 = vmatprep.subr.mxu0 0.0
  %528 = vmatpush1.msra.mxu0 0.0
  %529 = vmatprep.subr.mxu0 0.0
  %530 = vmatpush1.msra.mxu0 0.0
  %531 = vmatprep.subr.mxu0 0.0
  %532 = vmatpush1.msra.mxu0 0.0
  %533 = vmatprep.subr.mxu0 0.0
  %534 = vmatpush1.msra.mxu0 0.0
  %535 = vmatprep.subr.mxu0 0.0
  %536 = vmatpush1.msra.mxu0 0.0
  %537 = vmatprep.subr.mxu0 0.0
  %538 = vmatpush1.msra.mxu0 0.0
  %539 = vmatprep.subr.mxu0 0.0
  %540 = vmatpush1.msra.mxu0 0.0
  %541 = vmatprep.subr.mxu0 0.0
  %542 = vmatpush1.msra.mxu0 0.0
  %543 = vmatprep.subr.mxu0 0.0
  %544 = vmatpush1.msra.mxu0 0.0
  %545 = vmatprep.subr.mxu0 0.0
  %546 = vmatpush1.msra.mxu0 0.0
  %547 = vmatprep.subr.mxu0 0.0
  %548 = vmatpush1.msra.mxu0 0.0
  %549 = vmatprep.subr.mxu0 0.0
  %550 = vmatpush1.msra.mxu0 0.0
  %551 = vmatprep.subr.mxu0 0.0
  %552 = vmatpush1.msra.mxu0 0.0
  %553 = vmatprep.subr.mxu0 0.0
  %554 = vmatpush1.msra.mxu0 0.0
  %555 = vmatprep.subr.mxu0 0.0
  %556 = vmatpush1.msra.mxu0 0.0
  %557 = vmatprep.subr.mxu0 0.0
  %558 = vmatpush1.msra.mxu0 0.0
  %559 = vmatprep.subr.mxu0 0.0
  %560 = vmatpush1.msra.mxu0 0.0
  %561 = vmatprep.subr.mxu0 0.0
  %562 = vmatpush1.msra.mxu0 0.0
  %563 = vmatprep.subr.mxu0 0.0
  %564 = vmatpush1.msra.mxu0 0.0
  %565 = vmatprep.subr.mxu0 0.0
  %566 = vmatpush1.msra.mxu0 0.0
  %567 = vmatprep.subr.mxu0 0.0
  %568 = vmatpush1.msra.mxu0 0.0
  %569 = vmatprep.subr.mxu0 0.0
  %570 = vmatpush1.msra.mxu0 0.0
  %571 = vmatprep.subr.mxu0 0.0
  %572 = vmatpush1.msra.mxu0 0.0
  %573 = vmatprep.mubr.f32.mxu0 0.0
  %574 = vmatmul.mubr.f32.gmra.mrb[0].mxu0 %v507
  %v575 = vpop.f32.mrb[0].mxu0
  %v576 = vadd.f32 0.0, %v575
  %v577 = vpop.f32.mrb[0].mxu0
  %578 = vdwg.mxu0
  %v579 = vadd.f32 %v503, %v576
  %v580 = vxor.u32 %v579, 2147483648
  %v581 = vmul.f32 %v580, 1.442695
  %v582 = vpow.pop %v581
  %v583 = vadd.f32 %v582, 1.0
  %v584 = vrcp.pop %v583
  %v585 = vmul.f32 1.0, %v584
  %v586 = vtanh.pop %v579
  %v587 = vmul.f32 %v585, %v495
  %589 = vrot.lane.b32.xlu0 %v586, 32
  %v590 = vpop.permute.xlu0 %589
  %v592 = vmul.f32 %v585, %v590
  %594 = vrot.lane.b32.xlu0 %v592, 32
  %v595 = vpop.permute.xlu0 %594
  %v597 = vadd.f32 %v587, %v595
  %v598 = vtanh.pop %v597
  %600 = vrot.lane.b32.xlu0 %v598, 32
  %v601 = vpop.permute.xlu0 %600
  %v603 = vmul.f32 %v585, %v601
  %s604 = scalar_lea.vmem [#allocation2], 32
  %v605 = vld [vmem:[%s604] sm:$0xff]
  %607 = vrot.lane.b32.xlu0 %v603, 64
  %v608 = vpop.permute.xlu0 %607
  %v609 = vsel %vm195, %v608, 0
  %611 = vmatprep.subr.mxu0 0.0
  %612 = vmatpush1.msra.mxu0 %v188
  %613 = vmatprep.subr.mxu0 0.0
  %614 = vmatpush1.msra.mxu0 %v189
  %615 = vmatprep.subr.mxu0 0.0
  %616 = vmatpush1.msra.mxu0 %v190
  %617 = vmatprep.subr.mxu0 0.0
  %618 = vmatpush1.msra.mxu0 %v191
  %619 = vmatprep.subr.mxu0 0.0
  %620 = vmatpush1.msra.mxu0 0.0
  %621 = vmatprep.subr.mxu0 0.0
  %622 = vmatpush1.msra.mxu0 0.0
  %623 = vmatprep.subr.mxu0 0.0
  %624 = vmatpush1.msra.mxu0 0.0
  %625 = vmatprep.subr.mxu0 0.0
  %626 = vmatpush1.msra.mxu0 0.0
  %627 = vmatprep.subr.mxu0 0.0
  %628 = vmatpush1.msra.mxu0 0.0
  %629 = vmatprep.subr.mxu0 0.0
  %630 = vmatpush1.msra.mxu0 0.0
  %631 = vmatprep.subr.mxu0 0.0
  %632 = vmatpush1.msra.mxu0 0.0
  %633 = vmatprep.subr.mxu0 0.0
  %634 = vmatpush1.msra.mxu0 0.0
  %635 = vmatprep.subr.mxu0 0.0
  %636 = vmatpush1.msra.mxu0 0.0
  %637 = vmatprep.subr.mxu0 0.0
  %638 = vmatpush1.msra.mxu0 0.0
  %639 = vmatprep.subr.mxu0 0.0
  %640 = vmatpush1.msra.mxu0 0.0
  %641 = vmatprep.subr.mxu0 0.0
  %642 = vmatpush1.msra.mxu0 0.0
  %643 = vmatprep.subr.mxu0 0.0
  %644 = vmatpush1.msra.mxu0 0.0
  %645 = vmatprep.subr.mxu0 0.0
  %646 = vmatpush1.msra.mxu0 0.0
  %647 = vmatprep.subr.mxu0 0.0
  %648 = vmatpush1.msra.mxu0 0.0
  %649 = vmatprep.subr.mxu0 0.0
  %650 = vmatpush1.msra.mxu0 0.0
  %651 = vmatprep.subr.mxu0 0.0
  %652 = vmatpush1.msra.mxu0 0.0
  %653 = vmatprep.subr.mxu0 0.0
  %654 = vmatpush1.msra.mxu0 0.0
  %655 = vmatprep.subr.mxu0 0.0
  %656 = vmatpush1.msra.mxu0 0.0
  %657 = vmatprep.subr.mxu0 0.0
  %658 = vmatpush1.msra.mxu0 0.0
  %659 = vmatprep.subr.mxu0 0.0
  %660 = vmatpush1.msra.mxu0 0.0
  %661 = vmatprep.subr.mxu0 0.0
  %662 = vmatpush1.msra.mxu0 0.0
  %663 = vmatprep.subr.mxu0 0.0
  %664 = vmatpush1.msra.mxu0 0.0
  %665 = vmatprep.subr.mxu0 0.0
  %666 = vmatpush1.msra.mxu0 0.0
  %667 = vmatprep.subr.mxu0 0.0
  %668 = vmatpush1.msra.mxu0 0.0
  %669 = vmatprep.subr.mxu0 0.0
  %670 = vmatpush1.msra.mxu0 0.0
  %671 = vmatprep.subr.mxu0 0.0
  %672 = vmatpush1.msra.mxu0 0.0
  %673 = vmatprep.subr.mxu0 0.0
  %674 = vmatpush1.msra.mxu0 0.0
  %675 = vmatprep.mubr.f32.mxu0 0.0
  %676 = vmatmul.mubr.f32.gmra.mrb[0].mxu0 %v609
  %v677 = vpop.f32.mrb[0].mxu0
  %v678 = vadd.f32 0.0, %v677
  %v679 = vpop.f32.mrb[0].mxu0
  %680 = vdwg.mxu0
  %v681 = vadd.f32 %v605, %v678
  %v682 = vxor.u32 %v681, 2147483648
  %v683 = vmul.f32 %v682, 1.442695
  %v684 = vpow.pop %v683
  %v685 = vadd.f32 %v684, 1.0
  %v686 = vrcp.pop %v685
  %v687 = vmul.f32 1.0, %v686
  %v688 = vtanh.pop %v681
  %v689 = vmul.f32 %v687, %v597
  %691 = vrot.lane.b32.xlu0 %v688, 32
  %v692 = vpop.permute.xlu0 %691
  %v694 = vmul.f32 %v687, %v692
  %696 = vrot.lane.b32.xlu0 %v694, 32
  %v697 = vpop.permute.xlu0 %696
  %v699 = vadd.f32 %v689, %v697
  %v700 = vtanh.pop %v699
  %702 = vrot.lane.b32.xlu0 %v700, 32
  %v703 = vpop.permute.xlu0 %702
  %v705 = vmul.f32 %v687, %v703
  %s706 = scalar_lea.vmem [#allocation2], 40
  %v707 = vld [vmem:[%s706] sm:$0xff]
  %709 = vrot.lane.b32.xlu0 %v705, 64
  %v710 = vpop.permute.xlu0 %709
  %v711 = vsel %vm195, %v710, 0
  %713 = vmatprep.subr.mxu0 0.0
  %714 = vmatpush1.msra.mxu0 %v188
  %715 = vmatprep.subr.mxu0 0.0
  %716 = vmatpush1.msra.mxu0 %v189
  %717 = vmatprep.subr.mxu0 0.0
  %718 = vmatpush1.msra.mxu0 %v190
  %719 = vmatprep.subr.mxu0 0.0
  %720 = vmatpush1.msra.mxu0 %v191
  %721 = vmatprep.subr.mxu0 0.0
  %722 = vmatpush1.msra.mxu0 0.0
  %723 = vmatprep.subr.mxu0 0.0
  %724 = vmatpush1.msra.mxu0 0.0
  %725 = vmatprep.subr.mxu0 0.0
  %726 = vmatpush1.msra.mxu0 0.0
  %727 = vmatprep.subr.mxu0 0.0
  %728 = vmatpush1.msra.mxu0 0.0
  %729 = vmatprep.subr.mxu0 0.0
  %730 = vmatpush1.msra.mxu0 0.0
  %731 = vmatprep.subr.mxu0 0.0
  %732 = vmatpush1.msra.mxu0 0.0
  %733 = vmatprep.subr.mxu0 0.0
  %734 = vmatpush1.msra.mxu0 0.0
  %735 = vmatprep.subr.mxu0 0.0
  %736 = vmatpush1.msra.mxu0 0.0
  %737 = vmatprep.subr.mxu0 0.0
  %738 = vmatpush1.msra.mxu0 0.0
  %739 = vmatprep.subr.mxu0 0.0
  %740 = vmatpush1.msra.mxu0 0.0
  %741 = vmatprep.subr.mxu0 0.0
  %742 = vmatpush1.msra.mxu0 0.0
  %743 = vmatprep.subr.mxu0 0.0
  %744 = vmatpush1.msra.mxu0 0.0
  %745 = vmatprep.subr.mxu0 0.0
  %746 = vmatpush1.msra.mxu0 0.0
  %747 = vmatprep.subr.mxu0 0.0
  %748 = vmatpush1.msra.mxu0 0.0
  %749 = vmatprep.subr.mxu0 0.0
  %750 = vmatpush1.msra.mxu0 0.0
  %751 = vmatprep.subr.mxu0 0.0
  %752 = vmatpush1.msra.mxu0 0.0
  %753 = vmatprep.subr.mxu0 0.0
  %754 = vmatpush1.msra.mxu0 0.0
  %755 = vmatprep.subr.mxu0 0.0
  %756 = vmatpush1.msra.mxu0 0.0
  %757 = vmatprep.subr.mxu0 0.0
  %758 = vmatpush1.msra.mxu0 0.0
  %759 = vmatprep.subr.mxu0 0.0
  %760 = vmatpush1.msra.mxu0 0.0
  %761 = vmatprep.subr.mxu0 0.0
  %762 = vmatpush1.msra.mxu0 0.0
  %763 = vmatprep.subr.mxu0 0.0
  %764 = vmatpush1.msra.mxu0 0.0
  %765 = vmatprep.subr.mxu0 0.0
  %766 = vmatpush1.msra.mxu0 0.0
  %767 = vmatprep.subr.mxu0 0.0
  %768 = vmatpush1.msra.mxu0 0.0
  %769 = vmatprep.subr.mxu0 0.0
  %770 = vmatpush1.msra.mxu0 0.0
  %771 = vmatprep.subr.mxu0 0.0
  %772 = vmatpush1.msra.mxu0 0.0
  %773 = vmatprep.subr.mxu0 0.0
  %774 = vmatpush1.msra.mxu0 0.0
  %775 = vmatprep.subr.mxu0 0.0
  %776 = vmatpush1.msra.mxu0 0.0
  %777 = vmatprep.mubr.f32.mxu0 0.0
  %778 = vmatmul.mubr.f32.gmra.mrb[0].mxu0 %v711
  %v779 = vpop.f32.mrb[0].mxu0
  %v780 = vadd.f32 0.0, %v779
  %v781 = vpop.f32.mrb[0].mxu0
  %782 = vdwg.mxu0
  %v783 = vadd.f32 %v707, %v780
  %v784 = vxor.u32 %v783, 2147483648
  %v785 = vmul.f32 %v784, 1.442695
  %v786 = vpow.pop %v785
  %v787 = vadd.f32 %v786, 1.0
  %v788 = vrcp.pop %v787
  %v789 = vmul.f32 1.0, %v788
  %v790 = vtanh.pop %v783
  %v791 = vmul.f32 %v789, %v699
  %793 = vrot.lane.b32.xlu0 %v790, 32
  %v794 = vpop.permute.xlu0 %793
  %v796 = vmul.f32 %v789, %v794
  %798 = vrot.lane.b32.xlu0 %v796, 32
  %v799 = vpop.permute.xlu0 %798
  %v801 = vadd.f32 %v791, %v799
  %v802 = vtanh.pop %v801
  %804 = vrot.lane.b32.xlu0 %v802, 32
  %v805 = vpop.permute.xlu0 %804
  %v807 = vmul.f32 %v789, %v805
  %s808 = scalar_lea.vmem [#allocation2], 48
  %v809 = vld [vmem:[%s808] sm:$0xff]
  %811 = vrot.lane.b32.xlu0 %v807, 64
  %v812 = vpop.permute.xlu0 %811
  %v813 = vsel %vm195, %v812, 0
  %815 = vmatprep.subr.mxu0 0.0
  %816 = vmatpush1.msra.mxu0 %v188
  %817 = vmatprep.subr.mxu0 0.0
  %818 = vmatpush1.msra.mxu0 %v189
  %819 = vmatprep.subr.mxu0 0.0
  %820 = vmatpush1.msra.mxu0 %v190
  %821 = vmatprep.subr.mxu0 0.0
  %822 = vmatpush1.msra.mxu0 %v191
  %823 = vmatprep.subr.mxu0 0.0
  %824 = vmatpush1.msra.mxu0 0.0
  %825 = vmatprep.subr.mxu0 0.0
  %826 = vmatpush1.msra.mxu0 0.0
  %827 = vmatprep.subr.mxu0 0.0
  %828 = vmatpush1.msra.mxu0 0.0
  %829 = vmatprep.subr.mxu0 0.0
  %830 = vmatpush1.msra.mxu0 0.0
  %831 = vmatprep.subr.mxu0 0.0
  %832 = vmatpush1.msra.mxu0 0.0
  %833 = vmatprep.subr.mxu0 0.0
  %834 = vmatpush1.msra.mxu0 0.0
  %835 = vmatprep.subr.mxu0 0.0
  %836 = vmatpush1.msra.mxu0 0.0
  %837 = vmatprep.subr.mxu0 0.0
  %838 = vmatpush1.msra.mxu0 0.0
  %839 = vmatprep.subr.mxu0 0.0
  %840 = vmatpush1.msra.mxu0 0.0
  %841 = vmatprep.subr.mxu0 0.0
  %842 = vmatpush1.msra.mxu0 0.0
  %843 = vmatprep.subr.mxu0 0.0
  %844 = vmatpush1.msra.mxu0 0.0
  %845 = vmatprep.subr.mxu0 0.0
  %846 = vmatpush1.msra.mxu0 0.0
  %847 = vmatprep.subr.mxu0 0.0
  %848 = vmatpush1.msra.mxu0 0.0
  %849 = vmatprep.subr.mxu0 0.0
  %850 = vmatpush1.msra.mxu0 0.0
  %851 = vmatprep.subr.mxu0 0.0
  %852 = vmatpush1.msra.mxu0 0.0
  %853 = vmatprep.subr.mxu0 0.0
  %854 = vmatpush1.msra.mxu0 0.0
  %855 = vmatprep.subr.mxu0 0.0
  %856 = vmatpush1.msra.mxu0 0.0
  %857 = vmatprep.subr.mxu0 0.0
  %858 = vmatpush1.msra.mxu0 0.0
  %859 = vmatprep.subr.mxu0 0.0
  %860 = vmatpush1.msra.mxu0 0.0
  %861 = vmatprep.subr.mxu0 0.0
  %862 = vmatpush1.msra.mxu0 0.0
  %863 = vmatprep.subr.mxu0 0.0
  %864 = vmatpush1.msra.mxu0 0.0
  %865 = vmatprep.subr.mxu0 0.0
  %866 = vmatpush1.msra.mxu0 0.0
  %867 = vmatprep.subr.mxu0 0.0
  %868 = vmatpush1.msra.mxu0 0.0
  %869 = vmatprep.subr.mxu0 0.0
  %870 = vmatpush1.msra.mxu0 0.0
  %871 = vmatprep.subr.mxu0 0.0
  %872 = vmatpush1.msra.mxu0 0.0
  %873 = vmatprep.subr.mxu0 0.0
  %874 = vmatpush1.msra.mxu0 0.0
  %875 = vmatprep.subr.mxu0 0.0
  %876 = vmatpush1.msra.mxu0 0.0
  %877 = vmatprep.subr.mxu0 0.0
  %878 = vmatpush1.msra.mxu0 0.0
  %879 = vmatprep.mubr.f32.mxu0 0.0
  %880 = vmatmul.mubr.f32.gmra.mrb[0].mxu0 %v813
  %v881 = vpop.f32.mrb[0].mxu0
  %v882 = vadd.f32 0.0, %v881
  %v883 = vpop.f32.mrb[0].mxu0
  %884 = vdwg.mxu0
  %v885 = vadd.f32 %v809, %v882
  %v886 = vxor.u32 %v885, 2147483648
  %v887 = vmul.f32 %v886, 1.442695
  %v888 = vpow.pop %v887
  %v889 = vadd.f32 %v888, 1.0
  %v890 = vrcp.pop %v889
  %v891 = vmul.f32 1.0, %v890
  %v892 = vtanh.pop %v885
  %v893 = vmul.f32 %v891, %v801
  %895 = vrot.lane.b32.xlu0 %v892, 32
  %v896 = vpop.permute.xlu0 %895
  %v898 = vmul.f32 %v891, %v896
  %900 = vrot.lane.b32.xlu0 %v898, 32
  %v901 = vpop.permute.xlu0 %900
  %v903 = vadd.f32 %v893, %v901
  %v904 = vtanh.pop %v903
  %906 = vrot.lane.b32.xlu0 %v904, 32
  %v907 = vpop.permute.xlu0 %906
  %v909 = vmul.f32 %v891, %v907
  %s910 = scalar_lea.vmem [#allocation2], 56
  %v911 = vld [vmem:[%s910] sm:$0xff]
  %913 = vrot.lane.b32.xlu0 %v909, 64
  %v914 = vpop.permute.xlu0 %913
  %v915 = vsel %vm195, %v914, 0
  %917 = vmatprep.subr.mxu0 0.0
  %918 = vmatpush1.msra.mxu0 %v188
  %919 = vmatprep.subr.mxu0 0.0
  %920 = vmatpush1.msra.mxu0 %v189
  %921 = vmatprep.subr.mxu0 0.0
  %922 = vmatpush1.msra.mxu0 %v190
  %923 = vmatprep.subr.mxu0 0.0
  %924 = vmatpush1.msra.mxu0 %v191
  %925 = vmatprep.subr.mxu0 0.0
  %926 = vmatpush1.msra.mxu0 0.0
  %927 = vmatprep.subr.mxu0 0.0
  %928 = vmatpush1.msra.mxu0 0.0
  %929 = vmatprep.subr.mxu0 0.0
  %930 = vmatpush1.msra.mxu0 0.0
  %931 = vmatprep.subr.mxu0 0.0
  %932 = vmatpush1.msra.mxu0 0.0
  %933 = vmatprep.subr.mxu0 0.0
  %934 = vmatpush1.msra.mxu0 0.0
  %935 = vmatprep.subr.mxu0 0.0
  %936 = vmatpush1.msra.mxu0 0.0
  %937 = vmatprep.subr.mxu0 0.0
  %938 = vmatpush1.msra.mxu0 0.0
  %939 = vmatprep.subr.mxu0 0.0
  %940 = vmatpush1.msra.mxu0 0.0
  %941 = vmatprep.subr.mxu0 0.0
  %942 = vmatpush1.msra.mxu0 0.0
  %943 = vmatprep.subr.mxu0 0.0
  %944 = vmatpush1.msra.mxu0 0.0
  %945 = vmatprep.subr.mxu0 0.0
  %946 = vmatpush1.msra.mxu0 0.0
  %947 = vmatprep.subr.mxu0 0.0
  %948 = vmatpush1.msra.mxu0 0.0
  %949 = vmatprep.subr.mxu0 0.0
  %950 = vmatpush1.msra.mxu0 0.0
  %951 = vmatprep.subr.mxu0 0.0
  %952 = vmatpush1.msra.mxu0 0.0
  %953 = vmatprep.subr.mxu0 0.0
  %954 = vmatpush1.msra.mxu0 0.0
  %955 = vmatprep.subr.mxu0 0.0
  %956 = vmatpush1.msra.mxu0 0.0
  %957 = vmatprep.subr.mxu0 0.0
  %958 = vmatpush1.msra.mxu0 0.0
  %959 = vmatprep.subr.mxu0 0.0
  %960 = vmatpush1.msra.mxu0 0.0
  %961 = vmatprep.subr.mxu0 0.0
  %962 = vmatpush1.msra.mxu0 0.0
  %963 = vmatprep.subr.mxu0 0.0
  %964 = vmatpush1.msra.mxu0 0.0
  %965 = vmatprep.subr.mxu0 0.0
  %966 = vmatpush1.msra.mxu0 0.0
  %967 = vmatprep.subr.mxu0 0.0
  %968 = vmatpush1.msra.mxu0 0.0
  %969 = vmatprep.subr.mxu0 0.0
  %970 = vmatpush1.msra.mxu0 0.0
  %971 = vmatprep.subr.mxu0 0.0
  %972 = vmatpush1.msra.mxu0 0.0
  %973 = vmatprep.subr.mxu0 0.0
  %974 = vmatpush1.msra.mxu0 0.0
  %975 = vmatprep.subr.mxu0 0.0
  %976 = vmatpush1.msra.mxu0 0.0
  %977 = vmatprep.subr.mxu0 0.0
  %978 = vmatpush1.msra.mxu0 0.0
  %979 = vmatprep.subr.mxu0 0.0
  %980 = vmatpush1.msra.mxu0 0.0
  %981 = vmatprep.mubr.f32.mxu0 0.0
  %982 = vmatmul.mubr.f32.gmra.mrb[0].mxu0 %v915
  %v983 = vpop.f32.mrb[0].mxu0
  %v984 = vadd.f32 0.0, %v983
  %v985 = vpop.f32.mrb[0].mxu0
  %986 = vdwg.mxu0
  %v987 = vadd.f32 %v911, %v984
  %v988 = vxor.u32 %v987, 2147483648
  %v989 = vmul.f32 %v988, 1.442695
  %v990 = vpow.pop %v989
  %v991 = vadd.f32 %v990, 1.0
  %v992 = vrcp.pop %v991
  %v993 = vmul.f32 1.0, %v992
  %v994 = vtanh.pop %v987
  %v995 = vmul.f32 %v993, %v903
  %997 = vrot.lane.b32.xlu0 %v994, 32
  %v998 = vpop.permute.xlu0 %997
  %v1000 = vmul.f32 %v993, %v998
  %1002 = vrot.lane.b32.xlu0 %v1000, 32
  %v1003 = vpop.permute.xlu0 %1002
  %v1005 = vadd.f32 %v995, %v1003
  %v1006 = vtanh.pop %v1005
  %1008 = vrot.lane.b32.xlu0 %v1006, 32
  %v1009 = vpop.permute.xlu0 %1008
  %v1011 = vmul.f32 %v993, %v1009
  %1013 = vrot.lane.b32.xlu0 %v1011, 64
  %v1014 = vpop.permute.xlu0 %1013
  %1016 = vst.msk [vmem:[#allocation3] sm:$0xff] %vm195, %v1014
  %1018 = vrot.lane.b32.xlu0 %v1005, 96
  %v1019 = vpop.permute.xlu0 %1018
  %1021 = vst.msk [vmem:[#allocation4] sm:$0xff] %vm195, %v1019
  // Predicated region
  $region30: #{_forward_jit.1} parent=0 // pred_check
    %p1022 = pneg %p23
  $region31: #{_forward_jit.1} parent=0 // pred_check_branch
    %1024 = sbr.rel (%p1022) target = $region33
  $region32: #{_forward_jit.1} parent=0 // pred_region
    %v1025 = vld [vmem:[#allocation3] sm:$0xff]
    %v1026 = vld [vmem:[%s4] sm:$0xff]
    %v1027 = vld [vmem:[%s4 + $0x8] sm:$0xff]
    %v1028 = vld [vmem:[%s4 + $0x10] sm:$0xff]
    %v1029 = vld [vmem:[%s4 + $0x18] sm:$0xff]
    %v1030 = vld [vmem:[%s5] sm:$0x1]
    %v1032 = vlaneseq
    %v1033 = vshrl.u32 %v1032, 7
    %v1034 = vsub.s32 0, %v1033
    %v1035 = vrot.slane %v1030, %v1034
    %v1038 = vsel %vm195, %v1025, 0
    %1040 = vmatprep.subr.mxu0 0.0
    %1041 = vmatpush1.msra.mxu0 %v1026
    %1042 = vmatprep.subr.mxu0 0.0
    %1043 = vmatpush1.msra.mxu0 %v1027
    %1044 = vmatprep.subr.mxu0 0.0
    %1045 = vmatpush1.msra.mxu0 %v1028
    %1046 = vmatprep.subr.mxu0 0.0
    %1047 = vmatpush1.msra.mxu0 %v1029
    %1048 = vmatprep.subr.mxu0 0.0
    %1049 = vmatpush1.msra.mxu0 0.0
    %1050 = vmatprep.subr.mxu0 0.0
    %1051 = vmatpush1.msra.mxu0 0.0
    %1052 = vmatprep.subr.mxu0 0.0
    %1053 = vmatpush1.msra.mxu0 0.0
    %1054 = vmatprep.subr.mxu0 0.0
    %1055 = vmatpush1.msra.mxu0 0.0
    %1056 = vmatprep.subr.mxu0 0.0
    %1057 = vmatpush1.msra.mxu0 0.0
    %1058 = vmatprep.subr.mxu0 0.0
    %1059 = vmatpush1.msra.mxu0 0.0
    %1060 = vmatprep.subr.mxu0 0.0
    %1061 = vmatpush1.msra.mxu0 0.0
    %1062 = vmatprep.subr.mxu0 0.0
    %1063 = vmatpush1.msra.mxu0 0.0
    %1064 = vmatprep.subr.mxu0 0.0
    %1065 = vmatpush1.msra.mxu0 0.0
    %1066 = vmatprep.subr.mxu0 0.0
    %1067 = vmatpush1.msra.mxu0 0.0
    %1068 = vmatprep.subr.mxu0 0.0
    %1069 = vmatpush1.msra.mxu0 0.0
    %1070 = vmatprep.subr.mxu0 0.0
    %1071 = vmatpush1.msra.mxu0 0.0
    %1072 = vmatprep.subr.mxu0 0.0
    %1073 = vmatpush1.msra.mxu0 0.0
    %1074 = vmatprep.subr.mxu0 0.0
    %1075 = vmatpush1.msra.mxu0 0.0
    %1076 = vmatprep.subr.mxu0 0.0
    %1077 = vmatpush1.msra.mxu0 0.0
    %1078 = vmatprep.subr.mxu0 0.0
    %1079 = vmatpush1.msra.mxu0 0.0
    %1080 = vmatprep.subr.mxu0 0.0
    %1081 = vmatpush1.msra.mxu0 0.0
    %1082 = vmatprep.subr.mxu0 0.0
    %1083 = vmatpush1.msra.mxu0 0.0
    %1084 = vmatprep.subr.mxu0 0.0
    %1085 = vmatpush1.msra.mxu0 0.0
    %1086 = vmatprep.subr.mxu0 0.0
    %1087 = vmatpush1.msra.mxu0 0.0
    %1088 = vmatprep.subr.mxu0 0.0
    %1089 = vmatpush1.msra.mxu0 0.0
    %1090 = vmatprep.subr.mxu0 0.0
    %1091 = vmatpush1.msra.mxu0 0.0
    %1092 = vmatprep.subr.mxu0 0.0
    %1093 = vmatpush1.msra.mxu0 0.0
    %1094 = vmatprep.subr.mxu0 0.0
    %1095 = vmatpush1.msra.mxu0 0.0
    %1096 = vmatprep.subr.mxu0 0.0
    %1097 = vmatpush1.msra.mxu0 0.0
    %1098 = vmatprep.subr.mxu0 0.0
    %1099 = vmatpush1.msra.mxu0 0.0
    %1100 = vmatprep.subr.mxu0 0.0
    %1101 = vmatpush1.msra.mxu0 0.0
    %1102 = vmatprep.subr.mxu0 0.0
    %1103 = vmatpush1.msra.mxu0 0.0
    %1104 = vmatprep.mubr.f32.mxu0 0.0
    %1105 = vmatmul.mubr.f32.gmra.mrb[0].mxu0 %v1038
    %v1106 = vpop.f32.mrb[0].mxu0
    %v1107 = vadd.f32 %v1035, %v1106
    %v1108 = vpop.f32.mrb[0].mxu0
    %1109 = vdwg.mxu0
    %1110 = vst [vmem:[%s6] sm:$0xff] %v1107
  $region33: #{_forward_jit.1} parent=0 // pred_fallthru
    _
  // Predicated region
  $region34: #{_forward_jit.1} parent=0 // pred_check
    _
  $region35: #{_forward_jit.1} parent=0 // pred_check_branch
    %1112 = sbr.rel (0) target = $region37
  $region36: #{_forward_jit.1} parent=0 // pred_region
    _
  $region37: #{_forward_jit.1} parent=0 // pred_fallthru
    _
  // Predicated region
  $region38: #{_forward_jit.1} parent=0 // pred_check
    _
  $region39: #{_forward_jit.1} parent=0 // pred_check_branch
    %1114 = sbr.rel (0) target = $region41
  $region40: #{_forward_jit.1} parent=0 // pred_region
    _
  $region41: #{_forward_jit.1} parent=0 // pred_fallthru
    _

</llo_original>
